<compile_context>
chip_gen: v7x
topology: tpu7x:2x2x1
jax: 0.10.0
libtpu: 0.0.40
codegen_flags: <defaults>
</compile_context>

<pallas_src>
import jax
import jax.numpy as jnp
from jax.experimental import pallas as pl
from jax.experimental.pallas import tpu as pltpu

LANE = 128
SUBLANE_BF16 = 16  # bf16 packs 2 rows per f32 sublane -> round batch to 16


def _round_up(n, m):
    return ((n + m - 1) // m) * m


def _pad2(a, rows, cols, fill=0.0):
    r, c = a.shape
    return jnp.pad(a, ((0, rows - r), (0, cols - c)), constant_values=fill)


def _gating_kernel(scale_ref,                     # SMEM (1,): logit_scale
                   x_ref,                         # (tile_b, in_p) bf16
                   w0_ref, b0_ref,
                   w1_ref, b1_ref,
                   w2_ref, b2_ref,
                   w3_ref, b3_ref,
                   o_ref):
    """Fused 3-hidden-layer MLP + softmax + logit_scale for one batch tile.

    Weights are bf16 (lane-dense, 128-padded); matmul accumulation, bias-add
    and softmax are f32. 1/temperature is pre-folded into w3/b3. Padded logit
    columns carry a -1e30 bias so they vanish under softmax.
    """
    h = x_ref[...]  # already bf16 from the wrapper

    h = jnp.maximum(
        jnp.dot(h, w0_ref[...], preferred_element_type=jnp.float32) + b0_ref[...], 0.0)
    h = jnp.maximum(
        jnp.dot(h.astype(jnp.bfloat16), w1_ref[...],
                preferred_element_type=jnp.float32) + b1_ref[...], 0.0)
    h = jnp.maximum(
        jnp.dot(h.astype(jnp.bfloat16), w2_ref[...],
                preferred_element_type=jnp.float32) + b2_ref[...], 0.0)

    z = jnp.dot(h.astype(jnp.bfloat16), w3_ref[...],
                preferred_element_type=jnp.float32) + b3_ref[...]

    # numerically stable softmax(logits / T); 1/T already folded into w3/b3
    z = z - jnp.max(z, axis=-1, keepdims=True)
    e = jnp.exp(z)
    # fold logit_scale into the per-row reciprocal (one (tile_b,1) mul instead
    # of a second full-tile VPU multiply)
    inv = pl.reciprocal(jnp.sum(e, axis=-1, keepdims=True), approx=True) * scale_ref[0]
    o_ref[...] = (e * inv).astype(o_ref.dtype)


def _prepare_params(params, temperature):
    """Pad to lane-dense (multiples of 128), cast weights to bf16, fold 1/T."""
    w0, b0 = params["w0"], params["b0"]
    w1, b1 = params["w1"], params["b1"]
    w2, b2 = params["w2"], params["b2"]
    w3, b3 = params["w3"], params["b3"]

    in_f, hid = w0.shape
    out_f = w3.shape[1]
    in_p = _round_up(in_f, LANE)
    hid_p = _round_up(hid, LANE)
    out_p = _round_up(out_f, LANE)

    inv_t = 1.0 / float(temperature)
    w3 = w3 * inv_t
    b3 = b3 * inv_t

    prep = dict(
        w0=_pad2(w0, in_p, hid_p).astype(jnp.bfloat16),
        b0=_pad2(b0, 1, hid_p).astype(jnp.float32),
        w1=_pad2(w1, hid_p, hid_p).astype(jnp.bfloat16),
        b1=_pad2(b1, 1, hid_p).astype(jnp.float32),
        w2=_pad2(w2, hid_p, hid_p).astype(jnp.bfloat16),
        b2=_pad2(b2, 1, hid_p).astype(jnp.float32),
        # padded logit columns -> -1e30 bias so softmax ignores them
        w3=_pad2(w3, hid_p, out_p).astype(jnp.bfloat16),
        b3=_pad2(b3, 1, out_p, fill=-1e30).astype(jnp.float32),
        logit_scale=params["logit_scale"].astype(jnp.float32),
    )
    dims = dict(in_f=in_f, in_p=in_p, hid_p=hid_p, out_f=out_f, out_p=out_p)
    return prep, dims


def _vmem_cap_bytes():
    """Generation-aware scoped-VMEM ceiling (leave ~40% headroom for spills)."""
    try:
        phys = int(pltpu.get_tpu_info().vmem_capacity_bytes)
    except Exception:
        phys = 64 << 20  # conservative: assume v7x (64 MiB per TC)
    return max(16 << 20, int(phys * 0.6))


def gating_network_forward(x, params, *, temperature, tile_b=512):
    """x: (B, in_features) f32. params: dict with (in,out) weights, (1,out)
    biases, and scalar logit_scale of shape (1,). Returns (B, out_features) f32."""
    B, in_f = x.shape
    prep, dims = _prepare_params(params, temperature)
    in_p, hid_p = dims["in_p"], dims["hid_p"]
    out_f, out_p = dims["out_f"], dims["out_p"]
    assert in_f == dims["in_f"]

    # Batch tiling: bf16 input -> round to 16-row sublane packing. Keep
    # grid=(1,) for small batches (single TC on v5e/v6e; avoids duplicating
    # the weight DMA across v7x's two TCs); only tile when B_pad > tile_b.
    rows = _round_up(max(B, 1), SUBLANE_BF16)
    tile_b = max(SUBLANE_BF16, _round_up(min(int(tile_b), rows), SUBLANE_BF16))
    B_pad = _round_up(rows, tile_b)
    grid = (B_pad // tile_b,)

    x_pad = jnp.pad(x.astype(jnp.bfloat16), ((0, B_pad - B), (0, in_p - in_f)))

    def _nbytes(a):
        return int(a.size) * a.dtype.itemsize

    # Single-buffered weights (Buffered(1)) + double-buffered x (bf16) / out
    # (f32) tiles + f32 activation headroom.
    weight_bytes = sum(_nbytes(prep[k])
                       for k in ("w0", "b0", "w1", "b1", "w2", "b2", "w3", "b3"))
    io_tile_bytes = 2 * tile_b * in_p * 2 + 2 * tile_b * out_p * 4
    act_bytes = 6 * tile_b * max(hid_p, out_p) * 4
    cap = _vmem_cap_bytes()
    vmem_limit = int(min(weight_bytes + io_tile_bytes + act_bytes + (4 << 20), cap))

    full = lambda i: (0, 0)  # grid-invariant weights/biases

    def _run(single_buffer_weights):
        def wspec(shape):
            if single_buffer_weights:
                return pl.BlockSpec(shape, full, pipeline_mode=pl.Buffered(1))
            return pl.BlockSpec(shape, full)

        limit = vmem_limit if single_buffer_weights else int(
            min(vmem_limit + weight_bytes, cap))

        return pl.pallas_call(
            _gating_kernel,
            out_shape=jax.ShapeDtypeStruct((B_pad, out_p), jnp.float32),
            grid_spec=pltpu.PrefetchScalarGridSpec(
                num_scalar_prefetch=0,
                grid=grid,
                in_specs=[
                    pl.BlockSpec(memory_space=pltpu.MemorySpace.SMEM),     # logit_scale
                    pl.BlockSpec((tile_b, in_p), lambda i: (i, 0)),        # x tile (bf16)
                    wspec((in_p, hid_p)),                                  # w0
                    wspec((1, hid_p)),                                     # b0
                    wspec((hid_p, hid_p)),                                 # w1
                    wspec((1, hid_p)),                                     # b1
                    wspec((hid_p, hid_p)),                                 # w2
                    wspec((1, hid_p)),                                     # b2
                    wspec((hid_p, out_p)),                                 # w3 (/T)
                    wspec((1, out_p)),                                     # b3 (/T, -1e30 pad)
                ],
                out_specs=pl.BlockSpec((tile_b, out_p), lambda i: (i, 0)),
            ),
            compiler_params=pltpu.CompilerParams(
                dimension_semantics=("parallel",),
                vmem_limit_bytes=limit,
            ),
        )(prep["logit_scale"], x_pad,
          prep["w0"], prep["b0"], prep["w1"], prep["b1"],
          prep["w2"], prep["b2"], prep["w3"], prep["b3"])

    try:
        out = _run(single_buffer_weights=True)
    except Exception:
        # Fallback: if this Pallas build rejects Buffered(1), use default
        # double-buffering (correctness identical, just more VMEM).
        out = _run(single_buffer_weights=False)

    return out[:B, :out_f]


def init_params(key, in_features, hidden_dim, out_features, logit_scale=1.0):
    """Deterministic synthetic parameters. Weights stored transposed: (in, out)."""
    ks = jax.random.split(key, 8)

    def lin(kw, kb, fan_in, fan_out):
        bound = 1.0 / jnp.sqrt(fan_in)
        w = jax.random.uniform(kw, (fan_in, fan_out), jnp.float32, -bound, bound)
        b = jax.random.uniform(kb, (1, fan_out), jnp.float32, -bound, bound)
        return w, b

    w0, b0 = lin(ks[0], ks[1], in_features, hidden_dim)
    w1, b1 = lin(ks[2], ks[3], hidden_dim, hidden_dim)
    w2, b2 = lin(ks[4], ks[5], hidden_dim, hidden_dim)
    w3, b3 = lin(ks[6], ks[7], hidden_dim, out_features)
    return dict(w0=w0, b0=b0, w1=w1, b1=b1, w2=w2, b2=b2, w3=w3, b3=b3,
                logit_scale=jnp.ones((1,), jnp.float32) * logit_scale)


def reference_forward(x, params, *, temperature):
    h = x
    h = jax.nn.relu(h @ params["w0"] + params["b0"])
    h = jax.nn.relu(h @ params["w1"] + params["b1"])
    h = jax.nn.relu(h @ params["w2"] + params["b2"])
    logits = h @ params["w3"] + params["b3"]
    p = jax.nn.softmax(logits / temperature, axis=1)
    return p * params["logit_scale"][0]


if __name__ == "__main__":
    key = jax.random.PRNGKey(0)
    k_x, k_p = jax.random.split(key)

    batch = 16
    in_features = 64
    hidden_dim = 128
    out_features = 16
    temperature = 10.0
    logit_scale = 1.0

    x = jax.random.normal(k_x, (batch, in_features), jnp.float32)
    params = init_params(k_p, in_features, hidden_dim, out_features, logit_scale)

    out = gating_network_forward(x, params, temperature=temperature, tile_b=512)
    out = jax.block_until_ready(out)

    ref = reference_forward(x, params, temperature=temperature)
    assert out.shape == (batch, out_features)
    # bf16 weights/input inside the kernel + approx reciprocal -> loose tolerance
    assert jnp.allclose(out, ref, atol=3e-3, rtol=3e-3), "mismatch vs reference"
    # probabilities (times logit_scale=1) sum to 1 per row (approx reciprocal ~1e-3)
    assert jnp.allclose(jnp.sum(out, axis=1), 1.0, atol=2e-3)

    print("KERNEL_OK")
</pallas_src>

<mosaic_0001>
module attributes {stable_mosaic.version = 11 : i64} {
  func.func @_gating_kernel(%arg0: i32, %arg1: memref<1xf32, #tpu.memory_space<smem>>, %arg2: memref<16x128xbf16, #tpu.memory_space<vmem>>, %arg3: memref<128x128xbf16, #tpu.memory_space<vmem>>, %arg4: memref<1x128xf32, #tpu.memory_space<vmem>>, %arg5: memref<128x128xbf16, #tpu.memory_space<vmem>>, %arg6: memref<1x128xf32, #tpu.memory_space<vmem>>, %arg7: memref<128x128xbf16, #tpu.memory_space<vmem>>, %arg8: memref<1x128xf32, #tpu.memory_space<vmem>>, %arg9: memref<128x128xbf16, #tpu.memory_space<vmem>>, %arg10: memref<1x128xf32, #tpu.memory_space<vmem>>, %arg11: memref<16x128xf32, #tpu.memory_space<vmem>>) attributes {dimension_semantics = [#tpu.dimension_semantics<parallel>], iteration_bounds = array<i64: 1>, scalar_prefetch = 0 : i64, scratch_operands = 0 : i64, tpu.core_type = #tpu.core_type<tc>, window_params = [{transform_indices = @transform_0, window_bounds = array<i64: 1>}, {transform_indices = @transform_1, window_bounds = array<i64: 16, 128>}, {pipeline_mode = #tpu.pipeline_mode<synchronous>, transform_indices = @transform_2, window_bounds = array<i64: 128, 128>}, {pipeline_mode = #tpu.pipeline_mode<synchronous>, transform_indices = @transform_3, window_bounds = array<i64: 1, 128>}, {pipeline_mode = #tpu.pipeline_mode<synchronous>, transform_indices = @transform_4, window_bounds = array<i64: 128, 128>}, {pipeline_mode = #tpu.pipeline_mode<synchronous>, transform_indices = @transform_5, window_bounds = array<i64: 1, 128>}, {pipeline_mode = #tpu.pipeline_mode<synchronous>, transform_indices = @transform_6, window_bounds = array<i64: 128, 128>}, {pipeline_mode = #tpu.pipeline_mode<synchronous>, transform_indices = @transform_7, window_bounds = array<i64: 1, 128>}, {pipeline_mode = #tpu.pipeline_mode<synchronous>, transform_indices = @transform_8, window_bounds = array<i64: 128, 128>}, {pipeline_mode = #tpu.pipeline_mode<synchronous>, transform_indices = @transform_9, window_bounds = array<i64: 1, 128>}, {transform_indices = @transform_10, window_bounds = array<i64: 16, 128>}]} {
    %c0 = arith.constant 0 : index
    %c0_0 = arith.constant 0 : index
    %0 = vector.load %arg2[%c0, %c0_0] : memref<16x128xbf16, #tpu.memory_space<vmem>>, vector<16x128xbf16>
    %c0_1 = arith.constant 0 : index
    %c0_2 = arith.constant 0 : index
    %1 = vector.load %arg3[%c0_1, %c0_2] : memref<128x128xbf16, #tpu.memory_space<vmem>>, vector<128x128xbf16>
    %cst = arith.constant dense<0.000000e+00> : vector<16x128xf32>
    %2 = tpu.matmul %0, %1, %cst {dimension_numbers = #tpu.dot_dimension_numbers<[1], [0], [0], [1], [0, 0, 1, 1], [], []>} : vector<16x128xbf16>, vector<128x128xbf16>, vector<16x128xf32> -> vector<16x128xf32>
    %c0_3 = arith.constant 0 : index
    %c0_4 = arith.constant 0 : index
    %3 = vector.load %arg4[%c0_3, %c0_4] : memref<1x128xf32, #tpu.memory_space<vmem>>, vector<1x128xf32>
    %4 = vector.broadcast %3 : vector<1x128xf32> to vector<16x128xf32>
    %5 = arith.addf %2, %4 : vector<16x128xf32>
    %cst_5 = arith.constant 0.000000e+00 : f32
    %6 = vector.broadcast %cst_5 : f32 to vector<16x128xf32>
    %7 = arith.maximumf %5, %6 : vector<16x128xf32>
    %8 = arith.truncf %7 : vector<16x128xf32> to vector<16x128xbf16>
    %c0_6 = arith.constant 0 : index
    %c0_7 = arith.constant 0 : index
    %9 = vector.load %arg5[%c0_6, %c0_7] : memref<128x128xbf16, #tpu.memory_space<vmem>>, vector<128x128xbf16>
    %cst_8 = arith.constant dense<0.000000e+00> : vector<16x128xf32>
    %10 = tpu.matmul %8, %9, %cst_8 {dimension_numbers = #tpu.dot_dimension_numbers<[1], [0], [0], [1], [0, 0, 1, 1], [], []>} : vector<16x128xbf16>, vector<128x128xbf16>, vector<16x128xf32> -> vector<16x128xf32>
    %c0_9 = arith.constant 0 : index
    %c0_10 = arith.constant 0 : index
    %11 = vector.load %arg6[%c0_9, %c0_10] : memref<1x128xf32, #tpu.memory_space<vmem>>, vector<1x128xf32>
    %12 = vector.broadcast %11 : vector<1x128xf32> to vector<16x128xf32>
    %13 = arith.addf %10, %12 : vector<16x128xf32>
    %cst_11 = arith.constant 0.000000e+00 : f32
    %14 = vector.broadcast %cst_11 : f32 to vector<16x128xf32>
    %15 = arith.maximumf %13, %14 : vector<16x128xf32>
    %16 = arith.truncf %15 : vector<16x128xf32> to vector<16x128xbf16>
    %c0_12 = arith.constant 0 : index
    %c0_13 = arith.constant 0 : index
    %17 = vector.load %arg7[%c0_12, %c0_13] : memref<128x128xbf16, #tpu.memory_space<vmem>>, vector<128x128xbf16>
    %cst_14 = arith.constant dense<0.000000e+00> : vector<16x128xf32>
    %18 = tpu.matmul %16, %17, %cst_14 {dimension_numbers = #tpu.dot_dimension_numbers<[1], [0], [0], [1], [0, 0, 1, 1], [], []>} : vector<16x128xbf16>, vector<128x128xbf16>, vector<16x128xf32> -> vector<16x128xf32>
    %c0_15 = arith.constant 0 : index
    %c0_16 = arith.constant 0 : index
    %19 = vector.load %arg8[%c0_15, %c0_16] : memref<1x128xf32, #tpu.memory_space<vmem>>, vector<1x128xf32>
    %20 = vector.broadcast %19 : vector<1x128xf32> to vector<16x128xf32>
    %21 = arith.addf %18, %20 : vector<16x128xf32>
    %cst_17 = arith.constant 0.000000e+00 : f32
    %22 = vector.broadcast %cst_17 : f32 to vector<16x128xf32>
    %23 = arith.maximumf %21, %22 : vector<16x128xf32>
    %24 = arith.truncf %23 : vector<16x128xf32> to vector<16x128xbf16>
    %c0_18 = arith.constant 0 : index
    %c0_19 = arith.constant 0 : index
    %25 = vector.load %arg9[%c0_18, %c0_19] : memref<128x128xbf16, #tpu.memory_space<vmem>>, vector<128x128xbf16>
    %cst_20 = arith.constant dense<0.000000e+00> : vector<16x128xf32>
    %26 = tpu.matmul %24, %25, %cst_20 {dimension_numbers = #tpu.dot_dimension_numbers<[1], [0], [0], [1], [0, 0, 1, 1], [], []>} : vector<16x128xbf16>, vector<128x128xbf16>, vector<16x128xf32> -> vector<16x128xf32>
    %c0_21 = arith.constant 0 : index
    %c0_22 = arith.constant 0 : index
    %27 = vector.load %arg10[%c0_21, %c0_22] : memref<1x128xf32, #tpu.memory_space<vmem>>, vector<1x128xf32>
    %28 = vector.broadcast %27 : vector<1x128xf32> to vector<16x128xf32>
    %29 = arith.addf %26, %28 : vector<16x128xf32>
    %cst_23 = arith.constant dense<0xFF800000> : vector<16xf32>
    %30 = vector.multi_reduction <maximumf>, %29, %cst_23 [1] : vector<16x128xf32> to vector<16xf32>
    %31 = vector.shape_cast %30 : vector<16xf32> to vector<16x1xf32>
    %32 = vector.broadcast %31 : vector<16x1xf32> to vector<16x128xf32>
    %33 = arith.subf %29, %32 : vector<16x128xf32>
    %34 = math.exp %33 : vector<16x128xf32>
    %cst_24 = arith.constant dense<0.000000e+00> : vector<16xf32>
    %35 = vector.multi_reduction <add>, %34, %cst_24 [1] : vector<16x128xf32> to vector<16xf32>
    %36 = vector.shape_cast %35 : vector<16xf32> to vector<16x1xf32>
    %37 = tpu.reciprocal %36 {approx = true} : vector<16x1xf32> -> vector<16x1xf32>
    %c0_25 = arith.constant 0 : index
    %38 = memref.load %arg1[%c0_25] : memref<1xf32, #tpu.memory_space<smem>>
    %39 = vector.broadcast %38 : f32 to vector<16x1xf32>
    %40 = arith.mulf %37, %39 : vector<16x1xf32>
    %41 = vector.broadcast %40 : vector<16x1xf32> to vector<16x128xf32>
    %42 = arith.mulf %34, %41 : vector<16x128xf32>
    %c0_26 = arith.constant 0 : index
    %c0_27 = arith.constant 0 : index
    %43 = vector.load %arg11[%c0_26, %c0_27] : memref<16x128xf32, #tpu.memory_space<vmem>>, vector<16x128xf32>
    tpu.vector_store %arg11[%c0_26, %c0_27], %42 {strides = array<i32>} : memref<16x128xf32, #tpu.memory_space<vmem>>, vector<16x128xf32>,
    return
  }
  func.func @transform_0(%arg0: i32) -> i32 {
    %c0_i32 = arith.constant 0 : i32
    %c0_i32_0 = arith.constant 0 : i32
    return %c0_i32 : i32
  }
  func.func @transform_1(%arg0: i32) -> (i32, i32) {
    %c0_i32 = arith.constant 0 : i32
    %c0_i32_0 = arith.constant 0 : i32
    return %arg0, %c0_i32 : i32, i32
  }
  func.func @transform_2(%arg0: i32) -> (i32, i32) {
    %c0_i32 = arith.constant 0 : i32
    %c0_i32_0 = arith.constant 0 : i32
    %c0_i32_1 = arith.constant 0 : i32
    return %c0_i32, %c0_i32_0 : i32, i32
  }
  func.func @transform_3(%arg0: i32) -> (i32, i32) {
    %c0_i32 = arith.constant 0 : i32
    %c0_i32_0 = arith.constant 0 : i32
    %c0_i32_1 = arith.constant 0 : i32
    return %c0_i32, %c0_i32_0 : i32, i32
  }
  func.func @transform_4(%arg0: i32) -> (i32, i32) {
    %c0_i32 = arith.constant 0 : i32
    %c0_i32_0 = arith.constant 0 : i32
    %c0_i32_1 = arith.constant 0 : i32
    return %c0_i32, %c0_i32_0 : i32, i32
  }
  func.func @transform_5(%arg0: i32) -> (i32, i32) {
    %c0_i32 = arith.constant 0 : i32
    %c0_i32_0 = arith.constant 0 : i32
    %c0_i32_1 = arith.constant 0 : i32
    return %c0_i32, %c0_i32_0 : i32, i32
  }
  func.func @transform_6(%arg0: i32) -> (i32, i32) {
    %c0_i32 = arith.constant 0 : i32
    %c0_i32_0 = arith.constant 0 : i32
    %c0_i32_1 = arith.constant 0 : i32
    return %c0_i32, %c0_i32_0 : i32, i32
  }
  func.func @transform_7(%arg0: i32) -> (i32, i32) {
    %c0_i32 = arith.constant 0 : i32
    %c0_i32_0 = arith.constant 0 : i32
    %c0_i32_1 = arith.constant 0 : i32
    return %c0_i32, %c0_i32_0 : i32, i32
  }
  func.func @transform_8(%arg0: i32) -> (i32, i32) {
    %c0_i32 = arith.constant 0 : i32
    %c0_i32_0 = arith.constant 0 : i32
    %c0_i32_1 = arith.constant 0 : i32
    return %c0_i32, %c0_i32_0 : i32, i32
  }
  func.func @transform_9(%arg0: i32) -> (i32, i32) {
    %c0_i32 = arith.constant 0 : i32
    %c0_i32_0 = arith.constant 0 : i32
    %c0_i32_1 = arith.constant 0 : i32
    return %c0_i32, %c0_i32_0 : i32, i32
  }
  func.func @transform_10(%arg0: i32) -> (i32, i32) {
    %c0_i32 = arith.constant 0 : i32
    %c0_i32_0 = arith.constant 0 : i32
    return %arg0, %c0_i32 : i32, i32
  }
}

module attributes {stable_mosaic.version = 11 : i64} {
  func.func @_gating_kernel(%arg0: i32, %arg1: memref<1xf32, #tpu.memory_space<smem>>, %arg2: memref<16x128xbf16, #tpu.memory_space<vmem>>, %arg3: memref<128x128xbf16, #tpu.memory_space<vmem>>, %arg4: memref<1x128xf32, #tpu.memory_space<vmem>>, %arg5: memref<128x128xbf16, #tpu.memory_space<vmem>>, %arg6: memref<1x128xf32, #tpu.memory_space<vmem>>, %arg7: memref<128x128xbf16, #tpu.memory_space<vmem>>, %arg8: memref<1x128xf32, #tpu.memory_space<vmem>>, %arg9: memref<128x128xbf16, #tpu.memory_space<vmem>>, %arg10: memref<1x128xf32, #tpu.memory_space<vmem>>, %arg11: memref<16x128xf32, #tpu.memory_space<vmem>>) attributes {dimension_semantics = [#tpu.dimension_semantics<parallel>], iteration_bounds = array<i64: 1>, scalar_prefetch = 0 : i64, scratch_operands = 0 : i64, tpu.core_type = #tpu.core_type<tc>, window_params = [{transform_indices = @transform_0, window_bounds = array<i64: 1>}, {transform_indices = @transform_1, window_bounds = array<i64: 16, 128>}, {pipeline_mode = #tpu.pipeline_mode<synchronous>, transform_indices = @transform_2, window_bounds = array<i64: 128, 128>}, {pipeline_mode = #tpu.pipeline_mode<synchronous>, transform_indices = @transform_3, window_bounds = array<i64: 1, 128>}, {pipeline_mode = #tpu.pipeline_mode<synchronous>, transform_indices = @transform_4, window_bounds = array<i64: 128, 128>}, {pipeline_mode = #tpu.pipeline_mode<synchronous>, transform_indices = @transform_5, window_bounds = array<i64: 1, 128>}, {pipeline_mode = #tpu.pipeline_mode<synchronous>, transform_indices = @transform_6, window_bounds = array<i64: 128, 128>}, {pipeline_mode = #tpu.pipeline_mode<synchronous>, transform_indices = @transform_7, window_bounds = array<i64: 1, 128>}, {pipeline_mode = #tpu.pipeline_mode<synchronous>, transform_indices = @transform_8, window_bounds = array<i64: 128, 128>}, {pipeline_mode = #tpu.pipeline_mode<synchronous>, transform_indices = @transform_9, window_bounds = array<i64: 1, 128>}, {transform_indices = @transform_10, window_bounds = array<i64: 16, 128>}]} {
    %c0 = arith.constant 0 : index
    %c0_0 = arith.constant 0 : index
    %0 = vector.load %arg2[%c0, %c0_0] : memref<16x128xbf16, #tpu.memory_space<vmem>>, vector<16x128xbf16>
    %c0_1 = arith.constant 0 : index
    %c0_2 = arith.constant 0 : index
    %1 = vector.load %arg3[%c0_1, %c0_2] : memref<128x128xbf16, #tpu.memory_space<vmem>>, vector<128x128xbf16>
    %cst = arith.constant dense<0.000000e+00> : vector<16x128xf32>
    %2 = tpu.matmul %0, %1, %cst {dimension_numbers = #tpu.dot_dimension_numbers<[1], [0], [0], [1], [0, 0, 1, 1], [], []>} : vector<16x128xbf16>, vector<128x128xbf16>, vector<16x128xf32> -> vector<16x128xf32>
    %c0_3 = arith.constant 0 : index
    %c0_4 = arith.constant 0 : index
    %3 = vector.load %arg4[%c0_3, %c0_4] : memref<1x128xf32, #tpu.memory_space<vmem>>, vector<1x128xf32>
    %4 = vector.broadcast %3 : vector<1x128xf32> to vector<16x128xf32>
    %5 = arith.addf %2, %4 : vector<16x128xf32>
    %cst_5 = arith.constant 0.000000e+00 : f32
    %6 = vector.broadcast %cst_5 : f32 to vector<16x128xf32>
    %7 = arith.maximumf %5, %6 : vector<16x128xf32>
    %8 = arith.truncf %7 : vector<16x128xf32> to vector<16x128xbf16>
    %c0_6 = arith.constant 0 : index
    %c0_7 = arith.constant 0 : index
    %9 = vector.load %arg5[%c0_6, %c0_7] : memref<128x128xbf16, #tpu.memory_space<vmem>>, vector<128x128xbf16>
    %cst_8 = arith.constant dense<0.000000e+00> : vector<16x128xf32>
    %10 = tpu.matmul %8, %9, %cst_8 {dimension_numbers = #tpu.dot_dimension_numbers<[1], [0], [0], [1], [0, 0, 1, 1], [], []>} : vector<16x128xbf16>, vector<128x128xbf16>, vector<16x128xf32> -> vector<16x128xf32>
    %c0_9 = arith.constant 0 : index
    %c0_10 = arith.constant 0 : index
    %11 = vector.load %arg6[%c0_9, %c0_10] : memref<1x128xf32, #tpu.memory_space<vmem>>, vector<1x128xf32>
    %12 = vector.broadcast %11 : vector<1x128xf32> to vector<16x128xf32>
    %13 = arith.addf %10, %12 : vector<16x128xf32>
    %cst_11 = arith.constant 0.000000e+00 : f32
    %14 = vector.broadcast %cst_11 : f32 to vector<16x128xf32>
    %15 = arith.maximumf %13, %14 : vector<16x128xf32>
    %16 = arith.truncf %15 : vector<16x128xf32> to vector<16x128xbf16>
    %c0_12 = arith.constant 0 : index
    %c0_13 = arith.constant 0 : index
    %17 = vector.load %arg7[%c0_12, %c0_13] : memref<128x128xbf16, #tpu.memory_space<vmem>>, vector<128x128xbf16>
    %cst_14 = arith.constant dense<0.000000e+00> : vector<16x128xf32>
    %18 = tpu.matmul %16, %17, %cst_14 {dimension_numbers = #tpu.dot_dimension_numbers<[1], [0], [0], [1], [0, 0, 1, 1], [], []>} : vector<16x128xbf16>, vector<128x128xbf16>, vector<16x128xf32> -> vector<16x128xf32>
    %c0_15 = arith.constant 0 : index
    %c0_16 = arith.constant 0 : index
    %19 = vector.load %arg8[%c0_15, %c0_16] : memref<1x128xf32, #tpu.memory_space<vmem>>, vector<1x128xf32>
    %20 = vector.broadcast %19 : vector<1x128xf32> to vector<16x128xf32>
    %21 = arith.addf %18, %20 : vector<16x128xf32>
    %cst_17 = arith.constant 0.000000e+00 : f32
    %22 = vector.broadcast %cst_17 : f32 to vector<16x128xf32>
    %23 = arith.maximumf %21, %22 : vector<16x128xf32>
    %24 = arith.truncf %23 : vector<16x128xf32> to vector<16x128xbf16>
    %c0_18 = arith.constant 0 : index
    %c0_19 = arith.constant 0 : index
    %25 = vector.load %arg9[%c0_18, %c0_19] : memref<128x128xbf16, #tpu.memory_space<vmem>>, vector<128x128xbf16>
    %cst_20 = arith.constant dense<0.000000e+00> : vector<16x128xf32>
    %26 = tpu.matmul %24, %25, %cst_20 {dimension_numbers = #tpu.dot_dimension_numbers<[1], [0], [0], [1], [0, 0, 1, 1], [], []>} : vector<16x128xbf16>, vector<128x128xbf16>, vector<16x128xf32> -> vector<16x128xf32>
    %c0_21 = arith.constant 0 : index
    %c0_22 = arith.constant 0 : index
    %27 = vector.load %arg10[%c0_21, %c0_22] : memref<1x128xf32, #tpu.memory_space<vmem>>, vector<1x128xf32>
    %28 = vector.broadcast %27 : vector<1x128xf32> to vector<16x128xf32>
    %29 = arith.addf %26, %28 : vector<16x128xf32>
    %cst_23 = arith.constant dense<0xFF800000> : vector<16xf32>
    %30 = vector.multi_reduction <maximumf>, %29, %cst_23 [1] : vector<16x128xf32> to vector<16xf32>
    %31 = vector.shape_cast %30 : vector<16xf32> to vector<16x1xf32>
    %32 = vector.broadcast %31 : vector<16x1xf32> to vector<16x128xf32>
    %33 = arith.subf %29, %32 : vector<16x128xf32>
    %34 = math.exp %33 : vector<16x128xf32>
    %cst_24 = arith.constant dense<0.000000e+00> : vector<16xf32>
    %35 = vector.multi_reduction <add>, %34, %cst_24 [1] : vector<16x128xf32> to vector<16xf32>
    %36 = vector.shape_cast %35 : vector<16xf32> to vector<16x1xf32>
    %37 = tpu.reciprocal %36 {approx = true} : vector<16x1xf32> -> vector<16x1xf32>
    %c0_25 = arith.constant 0 : index
    %38 = memref.load %arg1[%c0_25] : memref<1xf32, #tpu.memory_space<smem>>
    %39 = vector.broadcast %38 : f32 to vector<16x1xf32>
    %40 = arith.mulf %37, %39 : vector<16x1xf32>
    %41 = vector.broadcast %40 : vector<16x1xf32> to vector<16x128xf32>
    %42 = arith.mulf %34, %41 : vector<16x128xf32>
    %c0_26 = arith.constant 0 : index
    %c0_27 = arith.constant 0 : index
    %43 = vector.load %arg11[%c0_26, %c0_27] : memref<16x128xf32, #tpu.memory_space<vmem>>, vector<16x128xf32>
    tpu.vector_store %arg11[%c0_26, %c0_27], %42 {strides = array<i32>} : memref<16x128xf32, #tpu.memory_space<vmem>>, vector<16x128xf32>,
    return
  }
  func.func @transform_0(%arg0: i32) -> i32 {
    %c0_i32 = arith.constant 0 : i32
    %c0_i32_0 = arith.constant 0 : i32
    return %c0_i32 : i32
  }
  func.func @transform_1(%arg0: i32) -> (i32, i32) {
    %c0_i32 = arith.constant 0 : i32
    %c0_i32_0 = arith.constant 0 : i32
    return %arg0, %c0_i32 : i32, i32
  }
  func.func @transform_2(%arg0: i32) -> (i32, i32) {
    %c0_i32 = arith.constant 0 : i32
    %c0_i32_0 = arith.constant 0 : i32
    %c0_i32_1 = arith.constant 0 : i32
    return %c0_i32, %c0_i32_0 : i32, i32
  }
  func.func @transform_3(%arg0: i32) -> (i32, i32) {
    %c0_i32 = arith.constant 0 : i32
    %c0_i32_0 = arith.constant 0 : i32
    %c0_i32_1 = arith.constant 0 : i32
    return %c0_i32, %c0_i32_0 : i32, i32
  }
  func.func @transform_4(%arg0: i32) -> (i32, i32) {
    %c0_i32 = arith.constant 0 : i32
    %c0_i32_0 = arith.constant 0 : i32
    %c0_i32_1 = arith.constant 0 : i32
    return %c0_i32, %c0_i32_0 : i32, i32
  }
  func.func @transform_5(%arg0: i32) -> (i32, i32) {
    %c0_i32 = arith.constant 0 : i32
    %c0_i32_0 = arith.constant 0 : i32
    %c0_i32_1 = arith.constant 0 : i32
    return %c0_i32, %c0_i32_0 : i32, i32
  }
  func.func @transform_6(%arg0: i32) -> (i32, i32) {
    %c0_i32 = arith.constant 0 : i32
    %c0_i32_0 = arith.constant 0 : i32
    %c0_i32_1 = arith.constant 0 : i32
    return %c0_i32, %c0_i32_0 : i32, i32
  }
  func.func @transform_7(%arg0: i32) -> (i32, i32) {
    %c0_i32 = arith.constant 0 : i32
    %c0_i32_0 = arith.constant 0 : i32
    %c0_i32_1 = arith.constant 0 : i32
    return %c0_i32, %c0_i32_0 : i32, i32
  }
  func.func @transform_8(%arg0: i32) -> (i32, i32) {
    %c0_i32 = arith.constant 0 : i32
    %c0_i32_0 = arith.constant 0 : i32
    %c0_i32_1 = arith.constant 0 : i32
    return %c0_i32, %c0_i32_0 : i32, i32
  }
  func.func @transform_9(%arg0: i32) -> (i32, i32) {
    %c0_i32 = arith.constant 0 : i32
    %c0_i32_0 = arith.constant 0 : i32
    %c0_i32_1 = arith.constant 0 : i32
    return %c0_i32, %c0_i32_0 : i32, i32
  }
  func.func @transform_10(%arg0: i32) -> (i32, i32) {
    %c0_i32 = arith.constant 0 : i32
    %c0_i32_0 = arith.constant 0 : i32
    return %arg0, %c0_i32 : i32, i32
  }
}

</mosaic_0001>

<llo_original>
// kernel: tpu_custom_call.1
$region0: #{tpu_custom_call.1}
  #allocation0 [shape = 'u32[]', space=smem, size = 0x4, offset = 0x4, fixed_abs, tag = 'smem constant byte address 0x4 - core index']
  #allocation1 [shape = 'u32[144,128]{1,0:T(1,128)}', space=vmem, size = 0x12000, scoped, tag = 'internal scratch']
  #allocation2 [shape = 'f32[1]{0:T(128)S(6)}', space=smem, size = 0x200, scoped, tag = 'scoped memory for tpu_custom_call.1']
  %s0 = inlined_call_operand.<no memory space> [shape: f32[1], index: 0, kind: input, shape index: {}]
  %s1 = inlined_call_operand.hbm [shape: bf16[16,128], index: 1, kind: input, shape index: {}]
  %s2 = inlined_call_operand.hbm [shape: bf16[128,128], index: 2, kind: input, shape index: {}]
  %s3 = inlined_call_operand.vmem [shape: f32[1,128], index: 3, kind: input, shape index: {}]
  %s4 = inlined_call_operand.hbm [shape: bf16[128,128], index: 4, kind: input, shape index: {}]
  %s5 = inlined_call_operand.vmem [shape: f32[1,128], index: 5, kind: input, shape index: {}]
  %s6 = inlined_call_operand.hbm [shape: bf16[128,128], index: 6, kind: input, shape index: {}]
  %s7 = inlined_call_operand.vmem [shape: f32[1,128], index: 7, kind: input, shape index: {}]
  %s8 = inlined_call_operand.hbm [shape: bf16[128,128], index: 8, kind: input, shape index: {}]
  %s9 = inlined_call_operand.vmem [shape: f32[1,128], index: 9, kind: input, shape index: {}]
  %s10 = inlined_call_operand.hbm [shape: f32[16,128], index: 10, kind: output, shape index: {}]
  %s11 = sld [smem:[#allocation0]]
  $region70: #{tpu_custom_call.1} parent=0
    _
  %s13 = ssub.s32 1, %s11
  %s14 = scalar_select 0, %s13, %s11
  %15 = sst [smem:[#allocation2]] %s0
  $region1: #{tpu_custom_call.1} parent=0
    #allocation3 [shape = 'u8[4096]{0}', space=vmem, size = 0x1000, scoped, tag = 'input window, operand 1, single buffered']
    #allocation4 [shape = 's32[1]{0}', space=sflag, size = 0x4, scoped, tag = 'scoped memory for tpu_custom_call.1']
    #allocation5 [shape = 's32[1]{0}', space=sflag, size = 0x4, scoped, tag = 'scoped memory for tpu_custom_call.1']
    #allocation6 [shape = 'u8[32768]{0}', space=vmem, size = 0x8000, scoped, tag = 'input window, operand 2, single buffered']
    #allocation7 [shape = 's32[1]{0}', space=sflag, size = 0x4, scoped, tag = 'scoped memory for tpu_custom_call.1']
    #allocation8 [shape = 'u8[32768]{0}', space=vmem, size = 0x8000, scoped, tag = 'input window, operand 4, single buffered']
    #allocation9 [shape = 'u8[32768]{0}', space=vmem, size = 0x8000, scoped, tag = 'input window, operand 6, single buffered']
    #allocation10 [shape = 's32[1]{0}', space=sflag, size = 0x4, scoped, tag = 'scoped memory for tpu_custom_call.1']
    #allocation11 [shape = 'u8[32768]{0}', space=vmem, size = 0x8000, scoped, tag = 'input window, operand 8, single buffered']
    #allocation12 [shape = 'u8[8192]{0}', space=vmem, size = 0x2000, scoped, tag = 'output window, operand 0, single buffered']
    %16 = vsyncpa [#allocation4], 0
    %17 = vsyncpa [#allocation7], 0
    %18 = vsyncpa [#allocation10], 0
    %19 = vsyncpa [#allocation5], 0
    // Predicated region
    $region2: #{tpu_custom_call.1} parent=1 // pred_check
      _
    $region3: #{tpu_custom_call.1} parent=1 // pred_check_branch
      %21 = sbr.rel (0) target = $region5
    $region4: #{tpu_custom_call.1} parent=1 // pred_region
      _
    $region5: #{tpu_custom_call.1} parent=1 // pred_fallthru
      _
    // Predicated region
    $region6: #{tpu_custom_call.1} parent=1 // pred_check
      _
    $region7: #{tpu_custom_call.1} parent=1 // pred_check_branch
      %23 = sbr.rel (0) target = $region9
    $region8: #{tpu_custom_call.1} parent=1 // pred_region
      %s25 = ssub.s32 128, 128
      %26 = vsyncadd [#allocation4], %s25
      %s27 = sshll.u32 [#allocation3], 4
      %s28 = int_to_ptr.vmem [resolvable:$true] %s27
      %33 = dma.hbm_to_vmem [thread:$0]  %s1, 128, %s28, [#allocation4], 64, 64, 4
    $region9: #{tpu_custom_call.1} parent=1 // pred_fallthru
      _
    // Predicated region
    $region10: #{tpu_custom_call.1} parent=1 // pred_check
      _
    $region11: #{tpu_custom_call.1} parent=1 // pred_check_branch
      %35 = sbr.rel (0) target = $region13
    $region12: #{tpu_custom_call.1} parent=1 // pred_region
      %s37 = ssub.s32 1024, 1024
      %38 = vsyncadd [#allocation7], %s37
      %s39 = sshll.u32 [#allocation6], 4
      %s40 = int_to_ptr.vmem [resolvable:$true] %s39
      %45 = dma.hbm_to_vmem [thread:$0]  %s2, 1024, %s40, [#allocation7], 64, 64, 4
    $region13: #{tpu_custom_call.1} parent=1 // pred_fallthru
      _
    // Predicated region
    $region14: #{tpu_custom_call.1} parent=1 // pred_check
      _
    $region15: #{tpu_custom_call.1} parent=1 // pred_check_branch
      %47 = sbr.rel (0) target = $region17
    $region16: #{tpu_custom_call.1} parent=1 // pred_region
      _
    $region17: #{tpu_custom_call.1} parent=1 // pred_fallthru
      _
    // Predicated region
    $region18: #{tpu_custom_call.1} parent=1 // pred_check
      _
    $region19: #{tpu_custom_call.1} parent=1 // pred_check_branch
      %49 = sbr.rel (0) target = $region21
    $region20: #{tpu_custom_call.1} parent=1 // pred_region
      %s51 = ssub.s32 1024, 1024
      %52 = vsyncadd [#allocation7], %s51
      %s53 = sshll.u32 [#allocation8], 4
      %s54 = int_to_ptr.vmem [resolvable:$true] %s53
      %59 = dma.hbm_to_vmem [thread:$0]  %s4, 1024, %s54, [#allocation7], 64, 64, 4
    $region21: #{tpu_custom_call.1} parent=1 // pred_fallthru
      _
    // Predicated region
    $region22: #{tpu_custom_call.1} parent=1 // pred_check
      _
    $region23: #{tpu_custom_call.1} parent=1 // pred_check_branch
      %61 = sbr.rel (0) target = $region25
    $region24: #{tpu_custom_call.1} parent=1 // pred_region
      _
    $region25: #{tpu_custom_call.1} parent=1 // pred_fallthru
      _
    // Predicated region
    $region26: #{tpu_custom_call.1} parent=1 // pred_check
      _
    $region27: #{tpu_custom_call.1} parent=1 // pred_check_branch
      %63 = sbr.rel (0) target = $region29
    $region28: #{tpu_custom_call.1} parent=1 // pred_region
      %s65 = ssub.s32 1024, 1024
      %66 = vsyncadd [#allocation10], %s65
      %s67 = sshll.u32 [#allocation9], 4
      %s68 = int_to_ptr.vmem [resolvable:$true] %s67
      %73 = dma.hbm_to_vmem [thread:$0]  %s6, 1024, %s68, [#allocation10], 64, 64, 4
    $region29: #{tpu_custom_call.1} parent=1 // pred_fallthru
      _
    // Predicated region
    $region30: #{tpu_custom_call.1} parent=1 // pred_check
      _
    $region31: #{tpu_custom_call.1} parent=1 // pred_check_branch
      %75 = sbr.rel (0) target = $region33
    $region32: #{tpu_custom_call.1} parent=1 // pred_region
      _
    $region33: #{tpu_custom_call.1} parent=1 // pred_fallthru
      _
    // Predicated region
    $region34: #{tpu_custom_call.1} parent=1 // pred_check
      _
    $region35: #{tpu_custom_call.1} parent=1 // pred_check_branch
      %77 = sbr.rel (0) target = $region37
    $region36: #{tpu_custom_call.1} parent=1 // pred_region
      %s79 = ssub.s32 1024, 1024
      %80 = vsyncadd [#allocation10], %s79
      %s81 = sshll.u32 [#allocation11], 4
      %s82 = int_to_ptr.vmem [resolvable:$true] %s81
      %87 = dma.hbm_to_vmem [thread:$0]  %s8, 1024, %s82, [#allocation10], 64, 64, 4
    $region37: #{tpu_custom_call.1} parent=1 // pred_fallthru
      _
    // Predicated region
    $region38: #{tpu_custom_call.1} parent=1 // pred_check
      _
    $region39: #{tpu_custom_call.1} parent=1 // pred_check_branch
      %89 = sbr.rel (0) target = $region41
    $region40: #{tpu_custom_call.1} parent=1 // pred_region
      _
    $region41: #{tpu_custom_call.1} parent=1 // pred_fallthru
      _
    // Predicated region
    $region42: #{tpu_custom_call.1} parent=1 // pred_check
      _
    $region43: #{tpu_custom_call.1} parent=1 // pred_check_branch
      %91 = sbr.rel (0) target = $region45
    $region44: #{tpu_custom_call.1} parent=1 // pred_region
      %92 = dma.done [#allocation4], 128
    $region45: #{tpu_custom_call.1} parent=1 // pred_fallthru
      _
    // Predicated region
    $region46: #{tpu_custom_call.1} parent=1 // pred_check
      _
    $region47: #{tpu_custom_call.1} parent=1 // pred_check_branch
      %94 = sbr.rel (0) target = $region49
    $region48: #{tpu_custom_call.1} parent=1 // pred_region
      %95 = dma.done [#allocation7], 1024
    $region49: #{tpu_custom_call.1} parent=1 // pred_fallthru
      _
    // Predicated region
    $region50: #{tpu_custom_call.1} parent=1 // pred_check
      _
    $region51: #{tpu_custom_call.1} parent=1 // pred_check_branch
      %97 = sbr.rel (0) target = $region53
    $region52: #{tpu_custom_call.1} parent=1 // pred_region
      %98 = dma.done [#allocation7], 1024
    $region53: #{tpu_custom_call.1} parent=1 // pred_fallthru
      _
    // Predicated region
    $region54: #{tpu_custom_call.1} parent=1 // pred_check
      _
    $region55: #{tpu_custom_call.1} parent=1 // pred_check_branch
      %100 = sbr.rel (0) target = $region57
    $region56: #{tpu_custom_call.1} parent=1 // pred_region
      %101 = dma.done [#allocation10], 1024
    $region57: #{tpu_custom_call.1} parent=1 // pred_fallthru
      _
    // Predicated region
    $region58: #{tpu_custom_call.1} parent=1 // pred_check
      _
    $region59: #{tpu_custom_call.1} parent=1 // pred_check_branch
      %103 = sbr.rel (0) target = $region61
    $region60: #{tpu_custom_call.1} parent=1 // pred_region
      %104 = dma.done [#allocation10], 1024
    $region61: #{tpu_custom_call.1} parent=1 // pred_fallthru
      _
    %v106 = vld [vmem:[#allocation3] sm:$0xf]
    %v107 = vld [vmem:[#allocation3 + $0x4] sm:$0xf]
    %v108 = vld [vmem:[#allocation6] sm:$0xf]
    %v109 = vld [vmem:[#allocation6 + $0x4] sm:$0xf]
    %v110 = vld [vmem:[#allocation6 + $0x8] sm:$0xf]
    %v111 = vld [vmem:[#allocation6 + $0xc] sm:$0xf]
    %v112 = vld [vmem:[#allocation6 + $0x10] sm:$0xf]
    %v113 = vld [vmem:[#allocation6 + $0x14] sm:$0xf]
    %v114 = vld [vmem:[#allocation6 + $0x18] sm:$0xf]
    %v115 = vld [vmem:[#allocation6 + $0x1c] sm:$0xf]
    %v116 = vld [vmem:[#allocation6 + $0x20] sm:$0xf]
    %v117 = vld [vmem:[#allocation6 + $0x24] sm:$0xf]
    %v118 = vld [vmem:[#allocation6 + $0x28] sm:$0xf]
    %v119 = vld [vmem:[#allocation6 + $0x2c] sm:$0xf]
    %v120 = vld [vmem:[#allocation6 + $0x30] sm:$0xf]
    %v121 = vld [vmem:[#allocation6 + $0x34] sm:$0xf]
    %v122 = vld [vmem:[#allocation6 + $0x38] sm:$0xf]
    %v123 = vld [vmem:[#allocation6 + $0x3c] sm:$0xf]
    %v124 = vld [vmem:[%s3] sm:$0x1]
    %v126 = vlaneseq
    %v127 = vshrl.u32 %v126, 7
    %v128 = vsub.s32 0, %v127
    %v129 = vrot.slane %v124, %v128
    %v133 = vunpack.c.l.b16 %v106
    %v134 = vunpack.c.l.b16 %v107
    %v135 = vpack.c.b16 %v134, %v133
    %v153 = vunpack.c.l.b16 %v108
    %v154 = vunpack.c.l.b16 %v109
    %v155 = vunpack.c.l.b16 %v110
    %v156 = vunpack.c.l.b16 %v111
    %v157 = vunpack.c.l.b16 %v112
    %v158 = vunpack.c.l.b16 %v113
    %v159 = vunpack.c.l.b16 %v114
    %v160 = vunpack.c.l.b16 %v115
    %v161 = vunpack.c.l.b16 %v116
    %v162 = vunpack.c.l.b16 %v117
    %v163 = vunpack.c.l.b16 %v118
    %v164 = vunpack.c.l.b16 %v119
    %v165 = vunpack.c.l.b16 %v120
    %v166 = vunpack.c.l.b16 %v121
    %v167 = vunpack.c.l.b16 %v122
    %v168 = vunpack.c.l.b16 %v123
    %v169 = vpack.c.b16 %v154, %v153
    %v170 = vpack.c.b16 %v156, %v155
    %v171 = vpack.c.b16 %v158, %v157
    %v172 = vpack.c.b16 %v160, %v159
    %v173 = vpack.c.b16 %v162, %v161
    %v174 = vpack.c.b16 %v164, %v163
    %v175 = vpack.c.b16 %v166, %v165
    %v176 = vpack.c.b16 %v168, %v167
    %185 = vmatprep.subr.bf16.mxu0 0
    %186 = vmatpush1.bf16.msra.mxu0 %v169
    %187 = vmatprep.subr.bf16.mxu0 0
    %188 = vmatpush1.bf16.msra.mxu0 %v170
    %189 = vmatprep.subr.bf16.mxu0 0
    %190 = vmatpush1.bf16.msra.mxu0 %v171
    %191 = vmatprep.subr.bf16.mxu0 0
    %192 = vmatpush1.bf16.msra.mxu0 %v172
    %193 = vmatprep.subr.bf16.mxu0 0
    %194 = vmatpush1.bf16.msra.mxu0 %v173
    %195 = vmatprep.subr.bf16.mxu0 0
    %196 = vmatpush1.bf16.msra.mxu0 %v174
    %197 = vmatprep.subr.bf16.mxu0 0
    %198 = vmatpush1.bf16.msra.mxu0 %v175
    %199 = vmatprep.subr.bf16.mxu0 0
    %200 = vmatpush1.bf16.msra.mxu0 %v176
    %201 = vmatprep.subr.bf16.mxu0 0
    %202 = vmatpush1.bf16.msra.mxu0 0
    %203 = vmatprep.subr.bf16.mxu0 0
    %204 = vmatpush1.bf16.msra.mxu0 0
    %205 = vmatprep.subr.bf16.mxu0 0
    %206 = vmatpush1.bf16.msra.mxu0 0
    %207 = vmatprep.subr.bf16.mxu0 0
    %208 = vmatpush1.bf16.msra.mxu0 0
    %209 = vmatprep.subr.bf16.mxu0 0
    %210 = vmatpush1.bf16.msra.mxu0 0
    %211 = vmatprep.subr.bf16.mxu0 0
    %212 = vmatpush1.bf16.msra.mxu0 0
    %213 = vmatprep.subr.bf16.mxu0 0
    %214 = vmatpush1.bf16.msra.mxu0 0
    %215 = vmatprep.subr.bf16.mxu0 0
    %216 = vmatpush1.bf16.msra.mxu0 0
    %217 = vmatprep.mubr.bf16.mxu0 0
    %218 = vmatmul.mubr.bf16.gmra.mrb[0].mxu0 %v135
    %v219 = vpop.f32.mrb[0].mxu0
    %v220 = vadd.f32 %v129, %v219
    %v221 = vpop.f32.mrb[0].mxu0
    %v222 = vpop.f32.mrb[0].mxu0
    %v223 = vadd.f32 %v129, %v222
    %v224 = vpop.f32.mrb[0].mxu0
    %225 = vdwg.mxu0
    %v226 = vmax.f32 %v220, 0.0
    %v227 = vmax.f32 %v223, 0.0
    %v228 = vpack.c.bf16 %v227, %v226
    %v229 = vld [vmem:[#allocation8] sm:$0xf]
    %v230 = vld [vmem:[#allocation8 + $0x4] sm:$0xf]
    %v231 = vld [vmem:[#allocation8 + $0x8] sm:$0xf]
    %v232 = vld [vmem:[#allocation8 + $0xc] sm:$0xf]
    %v233 = vld [vmem:[#allocation8 + $0x10] sm:$0xf]
    %v234 = vld [vmem:[#allocation8 + $0x14] sm:$0xf]
    %v235 = vld [vmem:[#allocation8 + $0x18] sm:$0xf]
    %v236 = vld [vmem:[#allocation8 + $0x1c] sm:$0xf]
    %v237 = vld [vmem:[#allocation8 + $0x20] sm:$0xf]
    %v238 = vld [vmem:[#allocation8 + $0x24] sm:$0xf]
    %v239 = vld [vmem:[#allocation8 + $0x28] sm:$0xf]
    %v240 = vld [vmem:[#allocation8 + $0x2c] sm:$0xf]
    %v241 = vld [vmem:[#allocation8 + $0x30] sm:$0xf]
    %v242 = vld [vmem:[#allocation8 + $0x34] sm:$0xf]
    %v243 = vld [vmem:[#allocation8 + $0x38] sm:$0xf]
    %v244 = vld [vmem:[#allocation8 + $0x3c] sm:$0xf]
    %v245 = vld [vmem:[%s5] sm:$0x1]
    %v247 = vlaneseq
    %v248 = vshrl.u32 %v247, 7
    %v249 = vsub.s32 0, %v248
    %v250 = vrot.slane %v245, %v249
    %v268 = vunpack.c.l.b16 %v229
    %v269 = vunpack.c.l.b16 %v230
    %v270 = vunpack.c.l.b16 %v231
    %v271 = vunpack.c.l.b16 %v232
    %v272 = vunpack.c.l.b16 %v233
    %v273 = vunpack.c.l.b16 %v234
    %v274 = vunpack.c.l.b16 %v235
    %v275 = vunpack.c.l.b16 %v236
    %v276 = vunpack.c.l.b16 %v237
    %v277 = vunpack.c.l.b16 %v238
    %v278 = vunpack.c.l.b16 %v239
    %v279 = vunpack.c.l.b16 %v240
    %v280 = vunpack.c.l.b16 %v241
    %v281 = vunpack.c.l.b16 %v242
    %v282 = vunpack.c.l.b16 %v243
    %v283 = vunpack.c.l.b16 %v244
    %v284 = vpack.c.b16 %v269, %v268
    %v285 = vpack.c.b16 %v271, %v270
    %v286 = vpack.c.b16 %v273, %v272
    %v287 = vpack.c.b16 %v275, %v274
    %v288 = vpack.c.b16 %v277, %v276
    %v289 = vpack.c.b16 %v279, %v278
    %v290 = vpack.c.b16 %v281, %v280
    %v291 = vpack.c.b16 %v283, %v282
    %300 = vmatprep.subr.bf16.mxu0 0
    %301 = vmatpush1.bf16.msra.mxu0 %v284
    %302 = vmatprep.subr.bf16.mxu0 0
    %303 = vmatpush1.bf16.msra.mxu0 %v285
    %304 = vmatprep.subr.bf16.mxu0 0
    %305 = vmatpush1.bf16.msra.mxu0 %v286
    %306 = vmatprep.subr.bf16.mxu0 0
    %307 = vmatpush1.bf16.msra.mxu0 %v287
    %308 = vmatprep.subr.bf16.mxu0 0
    %309 = vmatpush1.bf16.msra.mxu0 %v288
    %310 = vmatprep.subr.bf16.mxu0 0
    %311 = vmatpush1.bf16.msra.mxu0 %v289
    %312 = vmatprep.subr.bf16.mxu0 0
    %313 = vmatpush1.bf16.msra.mxu0 %v290
    %314 = vmatprep.subr.bf16.mxu0 0
    %315 = vmatpush1.bf16.msra.mxu0 %v291
    %316 = vmatprep.subr.bf16.mxu0 0
    %317 = vmatpush1.bf16.msra.mxu0 0
    %318 = vmatprep.subr.bf16.mxu0 0
    %319 = vmatpush1.bf16.msra.mxu0 0
    %320 = vmatprep.subr.bf16.mxu0 0
    %321 = vmatpush1.bf16.msra.mxu0 0
    %322 = vmatprep.subr.bf16.mxu0 0
    %323 = vmatpush1.bf16.msra.mxu0 0
    %324 = vmatprep.subr.bf16.mxu0 0
    %325 = vmatpush1.bf16.msra.mxu0 0
    %326 = vmatprep.subr.bf16.mxu0 0
    %327 = vmatpush1.bf16.msra.mxu0 0
    %328 = vmatprep.subr.bf16.mxu0 0
    %329 = vmatpush1.bf16.msra.mxu0 0
    %330 = vmatprep.subr.bf16.mxu0 0
    %331 = vmatpush1.bf16.msra.mxu0 0
    %332 = vmatprep.mubr.bf16.mxu0 0
    %333 = vmatmul.mubr.bf16.gmra.mrb[0].mxu0 %v228
    %v334 = vpop.f32.mrb[0].mxu0
    %v335 = vadd.f32 %v250, %v334
    %v336 = vpop.f32.mrb[0].mxu0
    %v337 = vpop.f32.mrb[0].mxu0
    %v338 = vadd.f32 %v250, %v337
    %v339 = vpop.f32.mrb[0].mxu0
    %340 = vdwg.mxu0
    %v341 = vmax.f32 %v335, 0.0
    %v342 = vmax.f32 %v338, 0.0
    %v343 = vpack.c.bf16 %v342, %v341
    %v344 = vld [vmem:[#allocation9] sm:$0xf]
    %v345 = vld [vmem:[#allocation9 + $0x4] sm:$0xf]
    %v346 = vld [vmem:[#allocation9 + $0x8] sm:$0xf]
    %v347 = vld [vmem:[#allocation9 + $0xc] sm:$0xf]
    %v348 = vld [vmem:[#allocation9 + $0x10] sm:$0xf]
    %v349 = vld [vmem:[#allocation9 + $0x14] sm:$0xf]
    %v350 = vld [vmem:[#allocation9 + $0x18] sm:$0xf]
    %v351 = vld [vmem:[#allocation9 + $0x1c] sm:$0xf]
    %v352 = vld [vmem:[#allocation9 + $0x20] sm:$0xf]
    %v353 = vld [vmem:[#allocation9 + $0x24] sm:$0xf]
    %v354 = vld [vmem:[#allocation9 + $0x28] sm:$0xf]
    %v355 = vld [vmem:[#allocation9 + $0x2c] sm:$0xf]
    %v356 = vld [vmem:[#allocation9 + $0x30] sm:$0xf]
    %v357 = vld [vmem:[#allocation9 + $0x34] sm:$0xf]
    %v358 = vld [vmem:[#allocation9 + $0x38] sm:$0xf]
    %v359 = vld [vmem:[#allocation9 + $0x3c] sm:$0xf]
    %v360 = vld [vmem:[%s7] sm:$0x1]
    %v362 = vlaneseq
    %v363 = vshrl.u32 %v362, 7
    %v364 = vsub.s32 0, %v363
    %v365 = vrot.slane %v360, %v364
    %v383 = vunpack.c.l.b16 %v344
    %v384 = vunpack.c.l.b16 %v345
    %v385 = vunpack.c.l.b16 %v346
    %v386 = vunpack.c.l.b16 %v347
    %v387 = vunpack.c.l.b16 %v348
    %v388 = vunpack.c.l.b16 %v349
    %v389 = vunpack.c.l.b16 %v350
    %v390 = vunpack.c.l.b16 %v351
    %v391 = vunpack.c.l.b16 %v352
    %v392 = vunpack.c.l.b16 %v353
    %v393 = vunpack.c.l.b16 %v354
    %v394 = vunpack.c.l.b16 %v355
    %v395 = vunpack.c.l.b16 %v356
    %v396 = vunpack.c.l.b16 %v357
    %v397 = vunpack.c.l.b16 %v358
    %v398 = vunpack.c.l.b16 %v359
    %v399 = vpack.c.b16 %v384, %v383
    %v400 = vpack.c.b16 %v386, %v385
    %v401 = vpack.c.b16 %v388, %v387
    %v402 = vpack.c.b16 %v390, %v389
    %v403 = vpack.c.b16 %v392, %v391
    %v404 = vpack.c.b16 %v394, %v393
    %v405 = vpack.c.b16 %v396, %v395
    %v406 = vpack.c.b16 %v398, %v397
    %415 = vmatprep.subr.bf16.mxu0 0
    %416 = vmatpush1.bf16.msra.mxu0 %v399
    %417 = vmatprep.subr.bf16.mxu0 0
    %418 = vmatpush1.bf16.msra.mxu0 %v400
    %419 = vmatprep.subr.bf16.mxu0 0
    %420 = vmatpush1.bf16.msra.mxu0 %v401
    %421 = vmatprep.subr.bf16.mxu0 0
    %422 = vmatpush1.bf16.msra.mxu0 %v402
    %423 = vmatprep.subr.bf16.mxu0 0
    %424 = vmatpush1.bf16.msra.mxu0 %v403
    %425 = vmatprep.subr.bf16.mxu0 0
    %426 = vmatpush1.bf16.msra.mxu0 %v404
    %427 = vmatprep.subr.bf16.mxu0 0
    %428 = vmatpush1.bf16.msra.mxu0 %v405
    %429 = vmatprep.subr.bf16.mxu0 0
    %430 = vmatpush1.bf16.msra.mxu0 %v406
    %431 = vmatprep.subr.bf16.mxu0 0
    %432 = vmatpush1.bf16.msra.mxu0 0
    %433 = vmatprep.subr.bf16.mxu0 0
    %434 = vmatpush1.bf16.msra.mxu0 0
    %435 = vmatprep.subr.bf16.mxu0 0
    %436 = vmatpush1.bf16.msra.mxu0 0
    %437 = vmatprep.subr.bf16.mxu0 0
    %438 = vmatpush1.bf16.msra.mxu0 0
    %439 = vmatprep.subr.bf16.mxu0 0
    %440 = vmatpush1.bf16.msra.mxu0 0
    %441 = vmatprep.subr.bf16.mxu0 0
    %442 = vmatpush1.bf16.msra.mxu0 0
    %443 = vmatprep.subr.bf16.mxu0 0
    %444 = vmatpush1.bf16.msra.mxu0 0
    %445 = vmatprep.subr.bf16.mxu0 0
    %446 = vmatpush1.bf16.msra.mxu0 0
    %447 = vmatprep.mubr.bf16.mxu0 0
    %448 = vmatmul.mubr.bf16.gmra.mrb[0].mxu0 %v343
    %v449 = vpop.f32.mrb[0].mxu0
    %v450 = vadd.f32 %v365, %v449
    %v451 = vpop.f32.mrb[0].mxu0
    %v452 = vpop.f32.mrb[0].mxu0
    %v453 = vadd.f32 %v365, %v452
    %v454 = vpop.f32.mrb[0].mxu0
    %455 = vdwg.mxu0
    %v456 = vmax.f32 %v450, 0.0
    %v457 = vmax.f32 %v453, 0.0
    %v458 = vpack.c.bf16 %v457, %v456
    %v459 = vld [vmem:[#allocation11] sm:$0xf]
    %v460 = vld [vmem:[#allocation11 + $0x4] sm:$0xf]
    %v461 = vld [vmem:[#allocation11 + $0x8] sm:$0xf]
    %v462 = vld [vmem:[#allocation11 + $0xc] sm:$0xf]
    %v463 = vld [vmem:[#allocation11 + $0x10] sm:$0xf]
    %v464 = vld [vmem:[#allocation11 + $0x14] sm:$0xf]
    %v465 = vld [vmem:[#allocation11 + $0x18] sm:$0xf]
    %v466 = vld [vmem:[#allocation11 + $0x1c] sm:$0xf]
    %v467 = vld [vmem:[#allocation11 + $0x20] sm:$0xf]
    %v468 = vld [vmem:[#allocation11 + $0x24] sm:$0xf]
    %v469 = vld [vmem:[#allocation11 + $0x28] sm:$0xf]
    %v470 = vld [vmem:[#allocation11 + $0x2c] sm:$0xf]
    %v471 = vld [vmem:[#allocation11 + $0x30] sm:$0xf]
    %v472 = vld [vmem:[#allocation11 + $0x34] sm:$0xf]
    %v473 = vld [vmem:[#allocation11 + $0x38] sm:$0xf]
    %v474 = vld [vmem:[#allocation11 + $0x3c] sm:$0xf]
    %v475 = vld [vmem:[%s9] sm:$0x1]
    %v477 = vlaneseq
    %v478 = vshrl.u32 %v477, 7
    %v479 = vsub.s32 0, %v478
    %v480 = vrot.slane %v475, %v479
    %v498 = vunpack.c.l.b16 %v459
    %v499 = vunpack.c.l.b16 %v460
    %v500 = vunpack.c.l.b16 %v461
    %v501 = vunpack.c.l.b16 %v462
    %v502 = vunpack.c.l.b16 %v463
    %v503 = vunpack.c.l.b16 %v464
    %v504 = vunpack.c.l.b16 %v465
    %v505 = vunpack.c.l.b16 %v466
    %v506 = vunpack.c.l.b16 %v467
    %v507 = vunpack.c.l.b16 %v468
    %v508 = vunpack.c.l.b16 %v469
    %v509 = vunpack.c.l.b16 %v470
    %v510 = vunpack.c.l.b16 %v471
    %v511 = vunpack.c.l.b16 %v472
    %v512 = vunpack.c.l.b16 %v473
    %v513 = vunpack.c.l.b16 %v474
    %v514 = vpack.c.b16 %v499, %v498
    %v515 = vpack.c.b16 %v501, %v500
    %v516 = vpack.c.b16 %v503, %v502
    %v517 = vpack.c.b16 %v505, %v504
    %v518 = vpack.c.b16 %v507, %v506
    %v519 = vpack.c.b16 %v509, %v508
    %v520 = vpack.c.b16 %v511, %v510
    %v521 = vpack.c.b16 %v513, %v512
    %530 = vmatprep.subr.bf16.mxu0 0
    %531 = vmatpush1.bf16.msra.mxu0 %v514
    %532 = vmatprep.subr.bf16.mxu0 0
    %533 = vmatpush1.bf16.msra.mxu0 %v515
    %534 = vmatprep.subr.bf16.mxu0 0
    %535 = vmatpush1.bf16.msra.mxu0 %v516
    %536 = vmatprep.subr.bf16.mxu0 0
    %537 = vmatpush1.bf16.msra.mxu0 %v517
    %538 = vmatprep.subr.bf16.mxu0 0
    %539 = vmatpush1.bf16.msra.mxu0 %v518
    %540 = vmatprep.subr.bf16.mxu0 0
    %541 = vmatpush1.bf16.msra.mxu0 %v519
    %542 = vmatprep.subr.bf16.mxu0 0
    %543 = vmatpush1.bf16.msra.mxu0 %v520
    %544 = vmatprep.subr.bf16.mxu0 0
    %545 = vmatpush1.bf16.msra.mxu0 %v521
    %546 = vmatprep.subr.bf16.mxu0 0
    %547 = vmatpush1.bf16.msra.mxu0 0
    %548 = vmatprep.subr.bf16.mxu0 0
    %549 = vmatpush1.bf16.msra.mxu0 0
    %550 = vmatprep.subr.bf16.mxu0 0
    %551 = vmatpush1.bf16.msra.mxu0 0
    %552 = vmatprep.subr.bf16.mxu0 0
    %553 = vmatpush1.bf16.msra.mxu0 0
    %554 = vmatprep.subr.bf16.mxu0 0
    %555 = vmatpush1.bf16.msra.mxu0 0
    %556 = vmatprep.subr.bf16.mxu0 0
    %557 = vmatpush1.bf16.msra.mxu0 0
    %558 = vmatprep.subr.bf16.mxu0 0
    %559 = vmatpush1.bf16.msra.mxu0 0
    %560 = vmatprep.subr.bf16.mxu0 0
    %561 = vmatpush1.bf16.msra.mxu0 0
    %562 = vmatprep.mubr.bf16.mxu0 0
    %563 = vmatmul.mubr.bf16.gmra.mrb[0].mxu0 %v458
    %v564 = vpop.f32.mrb[0].mxu0
    %v565 = vadd.f32 %v480, %v564
    %v566 = vpop.f32.mrb[0].mxu0
    %v567 = vpop.f32.mrb[0].mxu0
    %v568 = vadd.f32 %v480, %v567
    %v569 = vpop.f32.mrb[0].mxu0
    %570 = vdwg.mxu0
    %571 = vmax.xlane.f32.xlu0 %v565
    %v572 = vpop.xlane.xlu0 %571
    %573 = vmax.xlane.f32.xlu0 %v568
    %v574 = vpop.xlane.xlu0 %573
    %v575 = vsub.f32 %v565, %v572
    %v576 = vsub.f32 %v568, %v574
    %v577 = vmul.f32 %v575, 1.442695
    %v578 = vpow.pop %v577
    %v579 = vmul.f32 %v576, 1.442695
    %v580 = vpow.pop %v579
    %581 = vadd.xlane.f32.xlu0 %v578
    %v582 = vpop.xlane.xlu0 %581
    %583 = vadd.xlane.f32.xlu0 %v580
    %v584 = vpop.xlane.xlu0 %583
    %v585 = vrcp.pop %v582
    %v586 = vrcp.pop %v584
    %s587 = sld [smem:[#allocation2]]
    %v588 = vstv %s587
    %v589 = vmul.f32 %v585, %v588
    %v590 = vmul.f32 %v586, %v588
    %v591 = vmul.f32 %v578, %v589
    %v592 = vmul.f32 %v580, %v590
    %593 = vst [vmem:[#allocation12] sm:$0xff] %v591
    %594 = vst [vmem:[#allocation12 + $0x8] sm:$0xff] %v592
    // Predicated region
    $region62: #{tpu_custom_call.1} parent=1 // pred_check
      _
    $region63: #{tpu_custom_call.1} parent=1 // pred_check_branch
      %596 = sbr.rel (0) target = $region65
    $region64: #{tpu_custom_call.1} parent=1 // pred_region
      %s598 = ssub.s32 256, 256
      %599 = vsyncadd [#allocation5], %s598
      %s600 = sshll.u32 [#allocation12], 4
      %s601 = int_to_ptr.vmem [resolvable:$true] %s600
      %606 = dma.vmem_to_hbm [thread:$0]  %s601, 256, %s10, [#allocation5], 128, 128, 8
    $region65: #{tpu_custom_call.1} parent=1 // pred_fallthru
      _
    // Predicated region
    $region66: #{tpu_custom_call.1} parent=1 // pred_check
      _
    $region67: #{tpu_custom_call.1} parent=1 // pred_check_branch
      %608 = sbr.rel (0) target = $region69
    $region68: #{tpu_custom_call.1} parent=1 // pred_region
      %609 = dma.done [#allocation5], 256
    $region69: #{tpu_custom_call.1} parent=1 // pred_fallthru
      _
    %610 = vsyncpa [#allocation4], 1
    %611 = vsyncpa [#allocation7], 1
    %612 = vsyncpa [#allocation10], 1
    %613 = vsyncpa [#allocation5], 1

// kernel: tpu_custom_call.1
$region0: #{tpu_custom_call.1}
  #allocation0 [shape = 'u32[]', space=smem, size = 0x4, offset = 0x4, fixed_abs, tag = 'smem constant byte address 0x4 - core index']
  #allocation1 [shape = 'u32[144,128]{1,0:T(1,128)}', space=vmem, size = 0x12000, scoped, tag = 'internal scratch']
  #allocation2 [shape = 'f32[1]{0:T(128)S(6)}', space=smem, size = 0x200, scoped, tag = 'scoped memory for tpu_custom_call.1']
  %s0 = inlined_call_operand.<no memory space> [shape: f32[1], index: 0, kind: input, shape index: {}]
  %s1 = inlined_call_operand.hbm [shape: bf16[16,128], index: 1, kind: input, shape index: {}]
  %s2 = inlined_call_operand.hbm [shape: bf16[128,128], index: 2, kind: input, shape index: {}]
  %s3 = inlined_call_operand.vmem [shape: f32[1,128], index: 3, kind: input, shape index: {}]
  %s4 = inlined_call_operand.hbm [shape: bf16[128,128], index: 4, kind: input, shape index: {}]
  %s5 = inlined_call_operand.vmem [shape: f32[1,128], index: 5, kind: input, shape index: {}]
  %s6 = inlined_call_operand.hbm [shape: bf16[128,128], index: 6, kind: input, shape index: {}]
  %s7 = inlined_call_operand.vmem [shape: f32[1,128], index: 7, kind: input, shape index: {}]
  %s8 = inlined_call_operand.hbm [shape: bf16[128,128], index: 8, kind: input, shape index: {}]
  %s9 = inlined_call_operand.vmem [shape: f32[1,128], index: 9, kind: input, shape index: {}]
  %s10 = inlined_call_operand.hbm [shape: f32[16,128], index: 10, kind: output, shape index: {}]
  %s11 = sld [smem:[#allocation0]]
  $region70: #{tpu_custom_call.1} parent=0
    _
  %s13 = ssub.s32 1, %s11
  %s14 = scalar_select 0, %s13, %s11
  %15 = sst [smem:[#allocation2]] %s0
  $region1: #{tpu_custom_call.1} parent=0
    #allocation3 [shape = 'u8[4096]{0}', space=vmem, size = 0x1000, scoped, tag = 'input window, operand 1, single buffered']
    #allocation4 [shape = 's32[1]{0}', space=sflag, size = 0x4, scoped, tag = 'scoped memory for tpu_custom_call.1']
    #allocation5 [shape = 's32[1]{0}', space=sflag, size = 0x4, scoped, tag = 'scoped memory for tpu_custom_call.1']
    #allocation6 [shape = 'u8[32768]{0}', space=vmem, size = 0x8000, scoped, tag = 'input window, operand 2, single buffered']
    #allocation7 [shape = 's32[1]{0}', space=sflag, size = 0x4, scoped, tag = 'scoped memory for tpu_custom_call.1']
    #allocation8 [shape = 'u8[32768]{0}', space=vmem, size = 0x8000, scoped, tag = 'input window, operand 4, single buffered']
    #allocation9 [shape = 'u8[32768]{0}', space=vmem, size = 0x8000, scoped, tag = 'input window, operand 6, single buffered']
    #allocation10 [shape = 's32[1]{0}', space=sflag, size = 0x4, scoped, tag = 'scoped memory for tpu_custom_call.1']
    #allocation11 [shape = 'u8[32768]{0}', space=vmem, size = 0x8000, scoped, tag = 'input window, operand 8, single buffered']
    #allocation12 [shape = 'u8[8192]{0}', space=vmem, size = 0x2000, scoped, tag = 'output window, operand 0, single buffered']
    %16 = vsyncpa [#allocation4], 0
    %17 = vsyncpa [#allocation7], 0
    %18 = vsyncpa [#allocation10], 0
    %19 = vsyncpa [#allocation5], 0
    // Predicated region
    $region2: #{tpu_custom_call.1} parent=1 // pred_check
      _
    $region3: #{tpu_custom_call.1} parent=1 // pred_check_branch
      %21 = sbr.rel (0) target = $region5
    $region4: #{tpu_custom_call.1} parent=1 // pred_region
      _
    $region5: #{tpu_custom_call.1} parent=1 // pred_fallthru
      _
    // Predicated region
    $region6: #{tpu_custom_call.1} parent=1 // pred_check
      _
    $region7: #{tpu_custom_call.1} parent=1 // pred_check_branch
      %23 = sbr.rel (0) target = $region9
    $region8: #{tpu_custom_call.1} parent=1 // pred_region
      %s25 = ssub.s32 128, 128
      %26 = vsyncadd [#allocation4], %s25
      %s27 = sshll.u32 [#allocation3], 4
      %s28 = int_to_ptr.vmem [resolvable:$true] %s27
      %33 = dma.hbm_to_vmem [thread:$0]  %s1, 128, %s28, [#allocation4], 64, 64, 4
    $region9: #{tpu_custom_call.1} parent=1 // pred_fallthru
      _
    // Predicated region
    $region10: #{tpu_custom_call.1} parent=1 // pred_check
      _
    $region11: #{tpu_custom_call.1} parent=1 // pred_check_branch
      %35 = sbr.rel (0) target = $region13
    $region12: #{tpu_custom_call.1} parent=1 // pred_region
      %s37 = ssub.s32 1024, 1024
      %38 = vsyncadd [#allocation7], %s37
      %s39 = sshll.u32 [#allocation6], 4
      %s40 = int_to_ptr.vmem [resolvable:$true] %s39
      %45 = dma.hbm_to_vmem [thread:$0]  %s2, 1024, %s40, [#allocation7], 64, 64, 4
    $region13: #{tpu_custom_call.1} parent=1 // pred_fallthru
      _
    // Predicated region
    $region14: #{tpu_custom_call.1} parent=1 // pred_check
      _
    $region15: #{tpu_custom_call.1} parent=1 // pred_check_branch
      %47 = sbr.rel (0) target = $region17
    $region16: #{tpu_custom_call.1} parent=1 // pred_region
      _
    $region17: #{tpu_custom_call.1} parent=1 // pred_fallthru
      _
    // Predicated region
    $region18: #{tpu_custom_call.1} parent=1 // pred_check
      _
    $region19: #{tpu_custom_call.1} parent=1 // pred_check_branch
      %49 = sbr.rel (0) target = $region21
    $region20: #{tpu_custom_call.1} parent=1 // pred_region
      %s51 = ssub.s32 1024, 1024
      %52 = vsyncadd [#allocation7], %s51
      %s53 = sshll.u32 [#allocation8], 4
      %s54 = int_to_ptr.vmem [resolvable:$true] %s53
      %59 = dma.hbm_to_vmem [thread:$0]  %s4, 1024, %s54, [#allocation7], 64, 64, 4
    $region21: #{tpu_custom_call.1} parent=1 // pred_fallthru
      _
    // Predicated region
    $region22: #{tpu_custom_call.1} parent=1 // pred_check
      _
    $region23: #{tpu_custom_call.1} parent=1 // pred_check_branch
      %61 = sbr.rel (0) target = $region25
    $region24: #{tpu_custom_call.1} parent=1 // pred_region
      _
    $region25: #{tpu_custom_call.1} parent=1 // pred_fallthru
      _
    // Predicated region
    $region26: #{tpu_custom_call.1} parent=1 // pred_check
      _
    $region27: #{tpu_custom_call.1} parent=1 // pred_check_branch
      %63 = sbr.rel (0) target = $region29
    $region28: #{tpu_custom_call.1} parent=1 // pred_region
      %s65 = ssub.s32 1024, 1024
      %66 = vsyncadd [#allocation10], %s65
      %s67 = sshll.u32 [#allocation9], 4
      %s68 = int_to_ptr.vmem [resolvable:$true] %s67
      %73 = dma.hbm_to_vmem [thread:$0]  %s6, 1024, %s68, [#allocation10], 64, 64, 4
    $region29: #{tpu_custom_call.1} parent=1 // pred_fallthru
      _
    // Predicated region
    $region30: #{tpu_custom_call.1} parent=1 // pred_check
      _
    $region31: #{tpu_custom_call.1} parent=1 // pred_check_branch
      %75 = sbr.rel (0) target = $region33
    $region32: #{tpu_custom_call.1} parent=1 // pred_region
      _
    $region33: #{tpu_custom_call.1} parent=1 // pred_fallthru
      _
    // Predicated region
    $region34: #{tpu_custom_call.1} parent=1 // pred_check
      _
    $region35: #{tpu_custom_call.1} parent=1 // pred_check_branch
      %77 = sbr.rel (0) target = $region37
    $region36: #{tpu_custom_call.1} parent=1 // pred_region
      %s79 = ssub.s32 1024, 1024
      %80 = vsyncadd [#allocation10], %s79
      %s81 = sshll.u32 [#allocation11], 4
      %s82 = int_to_ptr.vmem [resolvable:$true] %s81
      %87 = dma.hbm_to_vmem [thread:$0]  %s8, 1024, %s82, [#allocation10], 64, 64, 4
    $region37: #{tpu_custom_call.1} parent=1 // pred_fallthru
      _
    // Predicated region
    $region38: #{tpu_custom_call.1} parent=1 // pred_check
      _
    $region39: #{tpu_custom_call.1} parent=1 // pred_check_branch
      %89 = sbr.rel (0) target = $region41
    $region40: #{tpu_custom_call.1} parent=1 // pred_region
      _
    $region41: #{tpu_custom_call.1} parent=1 // pred_fallthru
      _
    // Predicated region
    $region42: #{tpu_custom_call.1} parent=1 // pred_check
      _
    $region43: #{tpu_custom_call.1} parent=1 // pred_check_branch
      %91 = sbr.rel (0) target = $region45
    $region44: #{tpu_custom_call.1} parent=1 // pred_region
      %92 = dma.done [#allocation4], 128
    $region45: #{tpu_custom_call.1} parent=1 // pred_fallthru
      _
    // Predicated region
    $region46: #{tpu_custom_call.1} parent=1 // pred_check
      _
    $region47: #{tpu_custom_call.1} parent=1 // pred_check_branch
      %94 = sbr.rel (0) target = $region49
    $region48: #{tpu_custom_call.1} parent=1 // pred_region
      %95 = dma.done [#allocation7], 1024
    $region49: #{tpu_custom_call.1} parent=1 // pred_fallthru
      _
    // Predicated region
    $region50: #{tpu_custom_call.1} parent=1 // pred_check
      _
    $region51: #{tpu_custom_call.1} parent=1 // pred_check_branch
      %97 = sbr.rel (0) target = $region53
    $region52: #{tpu_custom_call.1} parent=1 // pred_region
      %98 = dma.done [#allocation7], 1024
    $region53: #{tpu_custom_call.1} parent=1 // pred_fallthru
      _
    // Predicated region
    $region54: #{tpu_custom_call.1} parent=1 // pred_check
      _
    $region55: #{tpu_custom_call.1} parent=1 // pred_check_branch
      %100 = sbr.rel (0) target = $region57
    $region56: #{tpu_custom_call.1} parent=1 // pred_region
      %101 = dma.done [#allocation10], 1024
    $region57: #{tpu_custom_call.1} parent=1 // pred_fallthru
      _
    // Predicated region
    $region58: #{tpu_custom_call.1} parent=1 // pred_check
      _
    $region59: #{tpu_custom_call.1} parent=1 // pred_check_branch
      %103 = sbr.rel (0) target = $region61
    $region60: #{tpu_custom_call.1} parent=1 // pred_region
      %104 = dma.done [#allocation10], 1024
    $region61: #{tpu_custom_call.1} parent=1 // pred_fallthru
      _
    %v106 = vld [vmem:[#allocation3] sm:$0xf]
    %v107 = vld [vmem:[#allocation3 + $0x4] sm:$0xf]
    %v108 = vld [vmem:[#allocation6] sm:$0xf]
    %v109 = vld [vmem:[#allocation6 + $0x4] sm:$0xf]
    %v110 = vld [vmem:[#allocation6 + $0x8] sm:$0xf]
    %v111 = vld [vmem:[#allocation6 + $0xc] sm:$0xf]
    %v112 = vld [vmem:[#allocation6 + $0x10] sm:$0xf]
    %v113 = vld [vmem:[#allocation6 + $0x14] sm:$0xf]
    %v114 = vld [vmem:[#allocation6 + $0x18] sm:$0xf]
    %v115 = vld [vmem:[#allocation6 + $0x1c] sm:$0xf]
    %v116 = vld [vmem:[#allocation6 + $0x20] sm:$0xf]
    %v117 = vld [vmem:[#allocation6 + $0x24] sm:$0xf]
    %v118 = vld [vmem:[#allocation6 + $0x28] sm:$0xf]
    %v119 = vld [vmem:[#allocation6 + $0x2c] sm:$0xf]
    %v120 = vld [vmem:[#allocation6 + $0x30] sm:$0xf]
    %v121 = vld [vmem:[#allocation6 + $0x34] sm:$0xf]
    %v122 = vld [vmem:[#allocation6 + $0x38] sm:$0xf]
    %v123 = vld [vmem:[#allocation6 + $0x3c] sm:$0xf]
    %v124 = vld [vmem:[%s3] sm:$0x1]
    %v126 = vlaneseq
    %v127 = vshrl.u32 %v126, 7
    %v128 = vsub.s32 0, %v127
    %v129 = vrot.slane %v124, %v128
    %v133 = vunpack.c.l.b16 %v106
    %v134 = vunpack.c.l.b16 %v107
    %v135 = vpack.c.b16 %v134, %v133
    %v153 = vunpack.c.l.b16 %v108
    %v154 = vunpack.c.l.b16 %v109
    %v155 = vunpack.c.l.b16 %v110
    %v156 = vunpack.c.l.b16 %v111
    %v157 = vunpack.c.l.b16 %v112
    %v158 = vunpack.c.l.b16 %v113
    %v159 = vunpack.c.l.b16 %v114
    %v160 = vunpack.c.l.b16 %v115
    %v161 = vunpack.c.l.b16 %v116
    %v162 = vunpack.c.l.b16 %v117
    %v163 = vunpack.c.l.b16 %v118
    %v164 = vunpack.c.l.b16 %v119
    %v165 = vunpack.c.l.b16 %v120
    %v166 = vunpack.c.l.b16 %v121
    %v167 = vunpack.c.l.b16 %v122
    %v168 = vunpack.c.l.b16 %v123
    %v169 = vpack.c.b16 %v154, %v153
    %v170 = vpack.c.b16 %v156, %v155
    %v171 = vpack.c.b16 %v158, %v157
    %v172 = vpack.c.b16 %v160, %v159
    %v173 = vpack.c.b16 %v162, %v161
    %v174 = vpack.c.b16 %v164, %v163
    %v175 = vpack.c.b16 %v166, %v165
    %v176 = vpack.c.b16 %v168, %v167
    %185 = vmatprep.subr.bf16.mxu0 0
    %186 = vmatpush1.bf16.msra.mxu0 %v169
    %187 = vmatprep.subr.bf16.mxu0 0
    %188 = vmatpush1.bf16.msra.mxu0 %v170
    %189 = vmatprep.subr.bf16.mxu0 0
    %190 = vmatpush1.bf16.msra.mxu0 %v171
    %191 = vmatprep.subr.bf16.mxu0 0
    %192 = vmatpush1.bf16.msra.mxu0 %v172
    %193 = vmatprep.subr.bf16.mxu0 0
    %194 = vmatpush1.bf16.msra.mxu0 %v173
    %195 = vmatprep.subr.bf16.mxu0 0
    %196 = vmatpush1.bf16.msra.mxu0 %v174
    %197 = vmatprep.subr.bf16.mxu0 0
    %198 = vmatpush1.bf16.msra.mxu0 %v175
    %199 = vmatprep.subr.bf16.mxu0 0
    %200 = vmatpush1.bf16.msra.mxu0 %v176
    %201 = vmatprep.subr.bf16.mxu0 0
    %202 = vmatpush1.bf16.msra.mxu0 0
    %203 = vmatprep.subr.bf16.mxu0 0
    %204 = vmatpush1.bf16.msra.mxu0 0
    %205 = vmatprep.subr.bf16.mxu0 0
    %206 = vmatpush1.bf16.msra.mxu0 0
    %207 = vmatprep.subr.bf16.mxu0 0
    %208 = vmatpush1.bf16.msra.mxu0 0
    %209 = vmatprep.subr.bf16.mxu0 0
    %210 = vmatpush1.bf16.msra.mxu0 0
    %211 = vmatprep.subr.bf16.mxu0 0
    %212 = vmatpush1.bf16.msra.mxu0 0
    %213 = vmatprep.subr.bf16.mxu0 0
    %214 = vmatpush1.bf16.msra.mxu0 0
    %215 = vmatprep.subr.bf16.mxu0 0
    %216 = vmatpush1.bf16.msra.mxu0 0
    %217 = vmatprep.mubr.bf16.mxu0 0
    %218 = vmatmul.mubr.bf16.gmra.mrb[0].mxu0 %v135
    %v219 = vpop.f32.mrb[0].mxu0
    %v220 = vadd.f32 %v129, %v219
    %v221 = vpop.f32.mrb[0].mxu0
    %v222 = vpop.f32.mrb[0].mxu0
    %v223 = vadd.f32 %v129, %v222
    %v224 = vpop.f32.mrb[0].mxu0
    %225 = vdwg.mxu0
    %v226 = vmax.f32 %v220, 0.0
    %v227 = vmax.f32 %v223, 0.0
    %v228 = vpack.c.bf16 %v227, %v226
    %v229 = vld [vmem:[#allocation8] sm:$0xf]
    %v230 = vld [vmem:[#allocation8 + $0x4] sm:$0xf]
    %v231 = vld [vmem:[#allocation8 + $0x8] sm:$0xf]
    %v232 = vld [vmem:[#allocation8 + $0xc] sm:$0xf]
    %v233 = vld [vmem:[#allocation8 + $0x10] sm:$0xf]
    %v234 = vld [vmem:[#allocation8 + $0x14] sm:$0xf]
    %v235 = vld [vmem:[#allocation8 + $0x18] sm:$0xf]
    %v236 = vld [vmem:[#allocation8 + $0x1c] sm:$0xf]
    %v237 = vld [vmem:[#allocation8 + $0x20] sm:$0xf]
    %v238 = vld [vmem:[#allocation8 + $0x24] sm:$0xf]
    %v239 = vld [vmem:[#allocation8 + $0x28] sm:$0xf]
    %v240 = vld [vmem:[#allocation8 + $0x2c] sm:$0xf]
    %v241 = vld [vmem:[#allocation8 + $0x30] sm:$0xf]
    %v242 = vld [vmem:[#allocation8 + $0x34] sm:$0xf]
    %v243 = vld [vmem:[#allocation8 + $0x38] sm:$0xf]
    %v244 = vld [vmem:[#allocation8 + $0x3c] sm:$0xf]
    %v245 = vld [vmem:[%s5] sm:$0x1]
    %v247 = vlaneseq
    %v248 = vshrl.u32 %v247, 7
    %v249 = vsub.s32 0, %v248
    %v250 = vrot.slane %v245, %v249
    %v268 = vunpack.c.l.b16 %v229
    %v269 = vunpack.c.l.b16 %v230
    %v270 = vunpack.c.l.b16 %v231
    %v271 = vunpack.c.l.b16 %v232
    %v272 = vunpack.c.l.b16 %v233
    %v273 = vunpack.c.l.b16 %v234
    %v274 = vunpack.c.l.b16 %v235
    %v275 = vunpack.c.l.b16 %v236
    %v276 = vunpack.c.l.b16 %v237
    %v277 = vunpack.c.l.b16 %v238
    %v278 = vunpack.c.l.b16 %v239
    %v279 = vunpack.c.l.b16 %v240
    %v280 = vunpack.c.l.b16 %v241
    %v281 = vunpack.c.l.b16 %v242
    %v282 = vunpack.c.l.b16 %v243
    %v283 = vunpack.c.l.b16 %v244
    %v284 = vpack.c.b16 %v269, %v268
    %v285 = vpack.c.b16 %v271, %v270
    %v286 = vpack.c.b16 %v273, %v272
    %v287 = vpack.c.b16 %v275, %v274
    %v288 = vpack.c.b16 %v277, %v276
    %v289 = vpack.c.b16 %v279, %v278
    %v290 = vpack.c.b16 %v281, %v280
    %v291 = vpack.c.b16 %v283, %v282
    %300 = vmatprep.subr.bf16.mxu0 0
    %301 = vmatpush1.bf16.msra.mxu0 %v284
    %302 = vmatprep.subr.bf16.mxu0 0
    %303 = vmatpush1.bf16.msra.mxu0 %v285
    %304 = vmatprep.subr.bf16.mxu0 0
    %305 = vmatpush1.bf16.msra.mxu0 %v286
    %306 = vmatprep.subr.bf16.mxu0 0
    %307 = vmatpush1.bf16.msra.mxu0 %v287
    %308 = vmatprep.subr.bf16.mxu0 0
    %309 = vmatpush1.bf16.msra.mxu0 %v288
    %310 = vmatprep.subr.bf16.mxu0 0
    %311 = vmatpush1.bf16.msra.mxu0 %v289
    %312 = vmatprep.subr.bf16.mxu0 0
    %313 = vmatpush1.bf16.msra.mxu0 %v290
    %314 = vmatprep.subr.bf16.mxu0 0
    %315 = vmatpush1.bf16.msra.mxu0 %v291
    %316 = vmatprep.subr.bf16.mxu0 0
    %317 = vmatpush1.bf16.msra.mxu0 0
    %318 = vmatprep.subr.bf16.mxu0 0
    %319 = vmatpush1.bf16.msra.mxu0 0
    %320 = vmatprep.subr.bf16.mxu0 0
    %321 = vmatpush1.bf16.msra.mxu0 0
    %322 = vmatprep.subr.bf16.mxu0 0
    %323 = vmatpush1.bf16.msra.mxu0 0
    %324 = vmatprep.subr.bf16.mxu0 0
    %325 = vmatpush1.bf16.msra.mxu0 0
    %326 = vmatprep.subr.bf16.mxu0 0
    %327 = vmatpush1.bf16.msra.mxu0 0
    %328 = vmatprep.subr.bf16.mxu0 0
    %329 = vmatpush1.bf16.msra.mxu0 0
    %330 = vmatprep.subr.bf16.mxu0 0
    %331 = vmatpush1.bf16.msra.mxu0 0
    %332 = vmatprep.mubr.bf16.mxu0 0
    %333 = vmatmul.mubr.bf16.gmra.mrb[0].mxu0 %v228
    %v334 = vpop.f32.mrb[0].mxu0
    %v335 = vadd.f32 %v250, %v334
    %v336 = vpop.f32.mrb[0].mxu0
    %v337 = vpop.f32.mrb[0].mxu0
    %v338 = vadd.f32 %v250, %v337
    %v339 = vpop.f32.mrb[0].mxu0
    %340 = vdwg.mxu0
    %v341 = vmax.f32 %v335, 0.0
    %v342 = vmax.f32 %v338, 0.0
    %v343 = vpack.c.bf16 %v342, %v341
    %v344 = vld [vmem:[#allocation9] sm:$0xf]
    %v345 = vld [vmem:[#allocation9 + $0x4] sm:$0xf]
    %v346 = vld [vmem:[#allocation9 + $0x8] sm:$0xf]
    %v347 = vld [vmem:[#allocation9 + $0xc] sm:$0xf]
    %v348 = vld [vmem:[#allocation9 + $0x10] sm:$0xf]
    %v349 = vld [vmem:[#allocation9 + $0x14] sm:$0xf]
    %v350 = vld [vmem:[#allocation9 + $0x18] sm:$0xf]
    %v351 = vld [vmem:[#allocation9 + $0x1c] sm:$0xf]
    %v352 = vld [vmem:[#allocation9 + $0x20] sm:$0xf]
    %v353 = vld [vmem:[#allocation9 + $0x24] sm:$0xf]
    %v354 = vld [vmem:[#allocation9 + $0x28] sm:$0xf]
    %v355 = vld [vmem:[#allocation9 + $0x2c] sm:$0xf]
    %v356 = vld [vmem:[#allocation9 + $0x30] sm:$0xf]
    %v357 = vld [vmem:[#allocation9 + $0x34] sm:$0xf]
    %v358 = vld [vmem:[#allocation9 + $0x38] sm:$0xf]
    %v359 = vld [vmem:[#allocation9 + $0x3c] sm:$0xf]
    %v360 = vld [vmem:[%s7] sm:$0x1]
    %v362 = vlaneseq
    %v363 = vshrl.u32 %v362, 7
    %v364 = vsub.s32 0, %v363
    %v365 = vrot.slane %v360, %v364
    %v383 = vunpack.c.l.b16 %v344
    %v384 = vunpack.c.l.b16 %v345
    %v385 = vunpack.c.l.b16 %v346
    %v386 = vunpack.c.l.b16 %v347
    %v387 = vunpack.c.l.b16 %v348
    %v388 = vunpack.c.l.b16 %v349
    %v389 = vunpack.c.l.b16 %v350
    %v390 = vunpack.c.l.b16 %v351
    %v391 = vunpack.c.l.b16 %v352
    %v392 = vunpack.c.l.b16 %v353
    %v393 = vunpack.c.l.b16 %v354
    %v394 = vunpack.c.l.b16 %v355
    %v395 = vunpack.c.l.b16 %v356
    %v396 = vunpack.c.l.b16 %v357
    %v397 = vunpack.c.l.b16 %v358
    %v398 = vunpack.c.l.b16 %v359
    %v399 = vpack.c.b16 %v384, %v383
    %v400 = vpack.c.b16 %v386, %v385
    %v401 = vpack.c.b16 %v388, %v387
    %v402 = vpack.c.b16 %v390, %v389
    %v403 = vpack.c.b16 %v392, %v391
    %v404 = vpack.c.b16 %v394, %v393
    %v405 = vpack.c.b16 %v396, %v395
    %v406 = vpack.c.b16 %v398, %v397
    %415 = vmatprep.subr.bf16.mxu0 0
    %416 = vmatpush1.bf16.msra.mxu0 %v399
    %417 = vmatprep.subr.bf16.mxu0 0
    %418 = vmatpush1.bf16.msra.mxu0 %v400
    %419 = vmatprep.subr.bf16.mxu0 0
    %420 = vmatpush1.bf16.msra.mxu0 %v401
    %421 = vmatprep.subr.bf16.mxu0 0
    %422 = vmatpush1.bf16.msra.mxu0 %v402
    %423 = vmatprep.subr.bf16.mxu0 0
    %424 = vmatpush1.bf16.msra.mxu0 %v403
    %425 = vmatprep.subr.bf16.mxu0 0
    %426 = vmatpush1.bf16.msra.mxu0 %v404
    %427 = vmatprep.subr.bf16.mxu0 0
    %428 = vmatpush1.bf16.msra.mxu0 %v405
    %429 = vmatprep.subr.bf16.mxu0 0
    %430 = vmatpush1.bf16.msra.mxu0 %v406
    %431 = vmatprep.subr.bf16.mxu0 0
    %432 = vmatpush1.bf16.msra.mxu0 0
    %433 = vmatprep.subr.bf16.mxu0 0
    %434 = vmatpush1.bf16.msra.mxu0 0
    %435 = vmatprep.subr.bf16.mxu0 0
    %436 = vmatpush1.bf16.msra.mxu0 0
    %437 = vmatprep.subr.bf16.mxu0 0
    %438 = vmatpush1.bf16.msra.mxu0 0
    %439 = vmatprep.subr.bf16.mxu0 0
    %440 = vmatpush1.bf16.msra.mxu0 0
    %441 = vmatprep.subr.bf16.mxu0 0
    %442 = vmatpush1.bf16.msra.mxu0 0
    %443 = vmatprep.subr.bf16.mxu0 0
    %444 = vmatpush1.bf16.msra.mxu0 0
    %445 = vmatprep.subr.bf16.mxu0 0
    %446 = vmatpush1.bf16.msra.mxu0 0
    %447 = vmatprep.mubr.bf16.mxu0 0
    %448 = vmatmul.mubr.bf16.gmra.mrb[0].mxu0 %v343
    %v449 = vpop.f32.mrb[0].mxu0
    %v450 = vadd.f32 %v365, %v449
    %v451 = vpop.f32.mrb[0].mxu0
    %v452 = vpop.f32.mrb[0].mxu0
    %v453 = vadd.f32 %v365, %v452
    %v454 = vpop.f32.mrb[0].mxu0
    %455 = vdwg.mxu0
    %v456 = vmax.f32 %v450, 0.0
    %v457 = vmax.f32 %v453, 0.0
    %v458 = vpack.c.bf16 %v457, %v456
    %v459 = vld [vmem:[#allocation11] sm:$0xf]
    %v460 = vld [vmem:[#allocation11 + $0x4] sm:$0xf]
    %v461 = vld [vmem:[#allocation11 + $0x8] sm:$0xf]
    %v462 = vld [vmem:[#allocation11 + $0xc] sm:$0xf]
    %v463 = vld [vmem:[#allocation11 + $0x10] sm:$0xf]
    %v464 = vld [vmem:[#allocation11 + $0x14] sm:$0xf]
    %v465 = vld [vmem:[#allocation11 + $0x18] sm:$0xf]
    %v466 = vld [vmem:[#allocation11 + $0x1c] sm:$0xf]
    %v467 = vld [vmem:[#allocation11 + $0x20] sm:$0xf]
    %v468 = vld [vmem:[#allocation11 + $0x24] sm:$0xf]
    %v469 = vld [vmem:[#allocation11 + $0x28] sm:$0xf]
    %v470 = vld [vmem:[#allocation11 + $0x2c] sm:$0xf]
    %v471 = vld [vmem:[#allocation11 + $0x30] sm:$0xf]
    %v472 = vld [vmem:[#allocation11 + $0x34] sm:$0xf]
    %v473 = vld [vmem:[#allocation11 + $0x38] sm:$0xf]
    %v474 = vld [vmem:[#allocation11 + $0x3c] sm:$0xf]
    %v475 = vld [vmem:[%s9] sm:$0x1]
    %v477 = vlaneseq
    %v478 = vshrl.u32 %v477, 7
    %v479 = vsub.s32 0, %v478
    %v480 = vrot.slane %v475, %v479
    %v498 = vunpack.c.l.b16 %v459
    %v499 = vunpack.c.l.b16 %v460
    %v500 = vunpack.c.l.b16 %v461
    %v501 = vunpack.c.l.b16 %v462
    %v502 = vunpack.c.l.b16 %v463
    %v503 = vunpack.c.l.b16 %v464
    %v504 = vunpack.c.l.b16 %v465
    %v505 = vunpack.c.l.b16 %v466
    %v506 = vunpack.c.l.b16 %v467
    %v507 = vunpack.c.l.b16 %v468
    %v508 = vunpack.c.l.b16 %v469
    %v509 = vunpack.c.l.b16 %v470
    %v510 = vunpack.c.l.b16 %v471
    %v511 = vunpack.c.l.b16 %v472
    %v512 = vunpack.c.l.b16 %v473
    %v513 = vunpack.c.l.b16 %v474
    %v514 = vpack.c.b16 %v499, %v498
    %v515 = vpack.c.b16 %v501, %v500
    %v516 = vpack.c.b16 %v503, %v502
    %v517 = vpack.c.b16 %v505, %v504
    %v518 = vpack.c.b16 %v507, %v506
    %v519 = vpack.c.b16 %v509, %v508
    %v520 = vpack.c.b16 %v511, %v510
    %v521 = vpack.c.b16 %v513, %v512
    %530 = vmatprep.subr.bf16.mxu0 0
    %531 = vmatpush1.bf16.msra.mxu0 %v514
    %532 = vmatprep.subr.bf16.mxu0 0
    %533 = vmatpush1.bf16.msra.mxu0 %v515
    %534 = vmatprep.subr.bf16.mxu0 0
    %535 = vmatpush1.bf16.msra.mxu0 %v516
    %536 = vmatprep.subr.bf16.mxu0 0
    %537 = vmatpush1.bf16.msra.mxu0 %v517
    %538 = vmatprep.subr.bf16.mxu0 0
    %539 = vmatpush1.bf16.msra.mxu0 %v518
    %540 = vmatprep.subr.bf16.mxu0 0
    %541 = vmatpush1.bf16.msra.mxu0 %v519
    %542 = vmatprep.subr.bf16.mxu0 0
    %543 = vmatpush1.bf16.msra.mxu0 %v520
    %544 = vmatprep.subr.bf16.mxu0 0
    %545 = vmatpush1.bf16.msra.mxu0 %v521
    %546 = vmatprep.subr.bf16.mxu0 0
    %547 = vmatpush1.bf16.msra.mxu0 0
    %548 = vmatprep.subr.bf16.mxu0 0
    %549 = vmatpush1.bf16.msra.mxu0 0
    %550 = vmatprep.subr.bf16.mxu0 0
    %551 = vmatpush1.bf16.msra.mxu0 0
    %552 = vmatprep.subr.bf16.mxu0 0
    %553 = vmatpush1.bf16.msra.mxu0 0
    %554 = vmatprep.subr.bf16.mxu0 0
    %555 = vmatpush1.bf16.msra.mxu0 0
    %556 = vmatprep.subr.bf16.mxu0 0
    %557 = vmatpush1.bf16.msra.mxu0 0
    %558 = vmatprep.subr.bf16.mxu0 0
    %559 = vmatpush1.bf16.msra.mxu0 0
    %560 = vmatprep.subr.bf16.mxu0 0
    %561 = vmatpush1.bf16.msra.mxu0 0
    %562 = vmatprep.mubr.bf16.mxu0 0
    %563 = vmatmul.mubr.bf16.gmra.mrb[0].mxu0 %v458
    %v564 = vpop.f32.mrb[0].mxu0
    %v565 = vadd.f32 %v480, %v564
    %v566 = vpop.f32.mrb[0].mxu0
    %v567 = vpop.f32.mrb[0].mxu0
    %v568 = vadd.f32 %v480, %v567
    %v569 = vpop.f32.mrb[0].mxu0
    %570 = vdwg.mxu0
    %571 = vmax.xlane.f32.xlu0 %v565
    %v572 = vpop.xlane.xlu0 %571
    %573 = vmax.xlane.f32.xlu0 %v568
    %v574 = vpop.xlane.xlu0 %573
    %v575 = vsub.f32 %v565, %v572
    %v576 = vsub.f32 %v568, %v574
    %v577 = vmul.f32 %v575, 1.442695
    %v578 = vpow.pop %v577
    %v579 = vmul.f32 %v576, 1.442695
    %v580 = vpow.pop %v579
    %581 = vadd.xlane.f32.xlu0 %v578
    %v582 = vpop.xlane.xlu0 %581
    %583 = vadd.xlane.f32.xlu0 %v580
    %v584 = vpop.xlane.xlu0 %583
    %v585 = vrcp.pop %v582
    %v586 = vrcp.pop %v584
    %s587 = sld [smem:[#allocation2]]
    %v588 = vstv %s587
    %v589 = vmul.f32 %v585, %v588
    %v590 = vmul.f32 %v586, %v588
    %v591 = vmul.f32 %v578, %v589
    %v592 = vmul.f32 %v580, %v590
    %593 = vst [vmem:[#allocation12] sm:$0xff] %v591
    %594 = vst [vmem:[#allocation12 + $0x8] sm:$0xff] %v592
    // Predicated region
    $region62: #{tpu_custom_call.1} parent=1 // pred_check
      _
    $region63: #{tpu_custom_call.1} parent=1 // pred_check_branch
      %596 = sbr.rel (0) target = $region65
    $region64: #{tpu_custom_call.1} parent=1 // pred_region
      %s598 = ssub.s32 256, 256
      %599 = vsyncadd [#allocation5], %s598
      %s600 = sshll.u32 [#allocation12], 4
      %s601 = int_to_ptr.vmem [resolvable:$true] %s600
      %606 = dma.vmem_to_hbm [thread:$0]  %s601, 256, %s10, [#allocation5], 128, 128, 8
    $region65: #{tpu_custom_call.1} parent=1 // pred_fallthru
      _
    // Predicated region
    $region66: #{tpu_custom_call.1} parent=1 // pred_check
      _
    $region67: #{tpu_custom_call.1} parent=1 // pred_check_branch
      %608 = sbr.rel (0) target = $region69
    $region68: #{tpu_custom_call.1} parent=1 // pred_region
      %609 = dma.done [#allocation5], 256
    $region69: #{tpu_custom_call.1} parent=1 // pred_fallthru
      _
    %610 = vsyncpa [#allocation4], 1
    %611 = vsyncpa [#allocation7], 1
    %612 = vsyncpa [#allocation10], 1
    %613 = vsyncpa [#allocation5], 1

</llo_original>
